<compile_context>
chip_gen: v6e
topology: v6e:2x2x1
jax: 0.10.0
libtpu: 0.0.40
codegen_flags: <defaults>
</compile_context>

<pallas_src>
import functools

import jax
import jax.numpy as jnp
from jax.experimental import pallas as pl
from jax.experimental.pallas import tpu as pltpu

BN_EPS = 1e-5
RMS_EPS = 1e-5


# ------------------------- fused dense-unit kernel -------------------------

def _dense_unit_kernel(x_ref, scale_ref, shift_ref, w_ref, b_ref, mask_ref,
                       pos_ref, rmsw_ref, out_ref, *, img_w):
    # Per grid step b (channels-first, tokens t = h*W + w on the lane axis):
    #   x_ref    : (1, Cin_pad, L)   f32   dense-stack features
    #   scale_ref: (Cin_pad, 1)      f32   gamma * rsqrt(var + eps)   (precomputed)
    #   shift_ref: (Cin_pad, 1)      f32   beta - mean * scale        (precomputed)
    #   w_ref    : (G, 9*Cin_pad)    bf16  conv taps, column = tap*Cin_pad + c, tap = ky*3+kx
    #   b_ref    : (G, 1)            f32
    #   mask_ref : (9, 1, L)         f32   per-tap border-validity masks (resident)
    #   pos_ref  : (G, L)            f32   learnable positional embedding (resident)
    #   rmsw_ref : (G, 1)            f32   RMSNorm weight
    #   out_ref  : (1, G, L)         f32   Tim_Block output tokens (lane-dense store)
    seq_len = out_ref.shape[2]

    # ---- ConvBlock (preactivation): BN(eval) -> ReLU, once, in f32.
    act = jnp.maximum(x_ref[0] * scale_ref[...] + shift_ref[...], 0.0)  # (Cin_pad, L)

    # ---- im2col built from XLU lane-rolls + border masks (no padded scratch,
    #      no zero-fill, no slice+reshape relayouts).
    slabs = []
    for ky in range(3):
        for kx in range(3):
            s = (ky - 1) * img_w + (kx - 1)        # source token offset for this tap
            shifted = act if s == 0 else pltpu.roll(act, (-s) % seq_len, 1)
            slabs.append(shifted * mask_ref[ky * 3 + kx])   # (Cin_pad, L), zeros at borders
    im2col = jnp.concatenate(slabs, axis=0).astype(jnp.bfloat16)        # (9*Cin_pad, L)

    # ---- Single MXU matmul (K = 9*Cin_pad), f32 accumulation, + bias.
    conv = jnp.dot(w_ref[...], im2col,
                   preferred_element_type=jnp.float32) + b_ref[...]     # (G, L)

    # ---- Tim_Block (fused_add_norm=True, residual=None) epilogue, channels-first.
    pos = pos_ref[...]
    seq = conv                                             # hidden_states_resdual
    hidden = seq + pos                                     # + learnable positional embed
    ms = jnp.mean(hidden * hidden, axis=0, keepdims=True)  # channel reduce = sublane reduce
    normed = hidden * jax.lax.rsqrt(ms + RMS_EPS) * rmsw_ref[...]
    # TODO(synk): Mamba_FFT mixer not provided in source -> identity passthrough.
    mixed = normed
    out_ref[0] = mixed + pos + seq                         # + pos_embed + pre-pos residual


def dense_unit(x_cfl, unit, masks, img_w):
    """One dense unit, fully fused.  x_cfl: (B, Cin_pad, L) f32 -> (B, G, L) f32."""
    b, cin_pad, l = x_cfl.shape
    g = unit["conv_b"].shape[0]
    assert l % 128 == 0, "token count must be lane-aligned (H*W multiple of 128)"

    kernel = functools.partial(_dense_unit_kernel, img_w=img_w)

    flops = 2 * b * g * l * 9 * cin_pad + 14 * b * g * l
    bytes_accessed = (4 * b * cin_pad * l + 4 * b * g * l + 2 * g * 9 * cin_pad
                      + 4 * (9 * l + g * l + 2 * cin_pad + 2 * g))
    cost = pl.CostEstimate(flops=flops, transcendentals=b * l,
                           bytes_accessed=bytes_accessed)

    return pl.pallas_call(
        kernel,
        out_shape=jax.ShapeDtypeStruct((b, g, l), jnp.float32),
        grid_spec=pltpu.PrefetchScalarGridSpec(
            num_scalar_prefetch=0,
            # TODO(synk): for v7x with B == 1, add a second parallel axis over
            #             token tiles (needs a 1-row halo) to keep both TCs busy.
            grid=(b,),
            in_specs=[
                pl.BlockSpec((1, cin_pad, l), lambda i: (i, 0, 0)),   # per-batch features
                pl.BlockSpec((cin_pad, 1), lambda i: (0, 0)),         # bn scale (resident)
                pl.BlockSpec((cin_pad, 1), lambda i: (0, 0)),         # bn shift (resident)
                pl.BlockSpec((g, 9 * cin_pad), lambda i: (0, 0)),     # conv taps (resident)
                pl.BlockSpec((g, 1), lambda i: (0, 0)),               # conv bias
                pl.BlockSpec((9, 1, l), lambda i: (0, 0, 0)),         # border masks (resident)
                pl.BlockSpec((g, l), lambda i: (0, 0)),               # pos embed (resident)
                pl.BlockSpec((g, 1), lambda i: (0, 0)),               # rmsnorm weight
            ],
            out_specs=pl.BlockSpec((1, g, l), lambda i: (i, 0, 0)),
        ),
        compiler_params=pltpu.CompilerParams(
            dimension_semantics=("parallel",),       # shard batch across TCs (v7x)
            vmem_limit_bytes=32 * 1024 * 1024,       # explicit, v7x-safe (64 MiB chip)
        ),
        cost_estimate=cost,
    )(x_cfl, unit["bn_scale"], unit["bn_shift"], unit["conv_w"],
      unit["conv_b"], masks, unit["pos"], unit["rms_w"])


# ------------------------- parameters, masks & forward driver -------------------------

def build_tap_masks(h, w):
    """(9, 1, H*W) f32 validity masks: mask[tap, 0, t] == 1 iff (h+ky-1, w+kx-1) in-bounds."""
    hh = jnp.arange(h)[:, None]
    ww = jnp.arange(w)[None, :]
    rows = []
    for ky in range(3):
        for kx in range(3):
            valid = ((hh + (ky - 1) >= 0) & (hh + (ky - 1) < h) &
                     (ww + (kx - 1) >= 0) & (ww + (kx - 1) < w))
            rows.append(valid.reshape(1, h * w))
    return jnp.stack(rows, axis=0).astype(jnp.float32)


def init_params(key, in_channels, units, growth_rate, seq_len):
    params = []
    c = in_channels
    for i in range(units):
        keys = jax.random.split(jax.random.fold_in(key, i), 8)
        cin_pad = ((c + 7) // 8) * 8                       # sublane-aligned channel count
        gamma = jax.random.normal(keys[0], (c,)) * 0.1 + 1.0
        beta = jax.random.normal(keys[1], (c,)) * 0.1
        mean = jax.random.normal(keys[2], (c,)) * 0.1
        var = jax.random.uniform(keys[3], (c,), minval=0.5, maxval=1.5)
        # Hoisted BN folding (eval mode, running stats); zero for padded channels.
        scale = gamma * jax.lax.rsqrt(var + BN_EPS)
        shift = beta - mean * scale
        conv_w = (jax.random.normal(keys[4], (3, 3, c, growth_rate))
                  * (1.0 / (9 * c) ** 0.5))
        conv_w = jnp.pad(conv_w, ((0, 0), (0, 0), (0, cin_pad - c), (0, 0)))
        # (G, 9*cin_pad), column = tap*cin_pad + channel, tap = ky*3 + kx; pre-cast bf16.
        w_mat = jnp.transpose(conv_w.reshape(9, cin_pad, growth_rate), (2, 0, 1))
        w_mat = w_mat.reshape(growth_rate, 9 * cin_pad).astype(jnp.bfloat16)
        params.append(dict(
            cin=c, cin_pad=cin_pad,
            bn_scale=jnp.pad(scale, (0, cin_pad - c)).reshape(cin_pad, 1).astype(jnp.float32),
            bn_shift=jnp.pad(shift, (0, cin_pad - c)).reshape(cin_pad, 1).astype(jnp.float32),
            conv_w=w_mat,
            conv_b=(jax.random.normal(keys[5], (growth_rate, 1)) * 0.01).astype(jnp.float32),
            rms_w=(jax.random.normal(keys[6], (growth_rate, 1)) * 0.1 + 1.0).astype(jnp.float32),
            # Per-Tim_Block learnable positional embedding, channels-first (G, L).
            pos=(jax.random.normal(keys[7], (growth_rate, seq_len)) * 0.02).astype(jnp.float32),
        ))
        c += growth_rate
    return params


def dense_feature_stack_forward(x_nchw, params, masks):
    """x_nchw: (B, Cin, H, W) f32 -> (B, Cin + units*G, H, W) f32 (NCHW end-to-end)."""
    b, _, h, w = x_nchw.shape
    l = h * w
    stack = [x_nchw.astype(jnp.float32)]
    for unit in params:
        inp = jnp.concatenate(stack, axis=1)               # dense concat (channel dim, NCHW)
        cin, cin_pad = inp.shape[1], unit["cin_pad"]
        x_cfl = inp.reshape(b, cin, l)                      # channels-first, tokens on lanes
        if cin_pad > cin:
            x_cfl = jnp.pad(x_cfl, ((0, 0), (0, cin_pad - cin), (0, 0)))
        out_seq = dense_unit(x_cfl, unit, masks, w)         # (B, G, L) fused kernel
        stack.append(out_seq.reshape(b, out_seq.shape[1], h, w))
    return jnp.concatenate(stack, axis=1)


# ------------------------- pure-JAX reference (same math) -------------------------

def _reference_forward(x_nchw, params, h, w):
    b = x_nchw.shape[0]
    l = h * w
    stack = [x_nchw.astype(jnp.float32)]
    for unit in params:
        inp = jnp.concatenate(stack, axis=1)
        cin = inp.shape[1]
        g = unit["conv_b"].shape[0]
        scale = unit["bn_scale"][:cin, 0]
        shift = unit["bn_shift"][:cin, 0]
        act = jnp.maximum(inp * scale[None, :, None, None]
                          + shift[None, :, None, None], 0.0)
        padded = jnp.pad(act, ((0, 0), (0, 0), (1, 1), (1, 1)))
        w_taps = unit["conv_w"].reshape(g, 9, unit["cin_pad"])[:, :, :cin]   # (G, 9, cin) bf16
        conv = jnp.zeros((b, g, h, w), jnp.float32)
        for tap in range(9):
            ky, kx = divmod(tap, 3)
            lhs = padded[:, :, ky:ky + h, kx:kx + w].astype(jnp.bfloat16)
            conv = conv + jnp.einsum("bchw,gc->bghw", lhs, w_taps[:, tap, :],
                                     preferred_element_type=jnp.float32)
        conv = conv + unit["conv_b"][:, 0][None, :, None, None]
        seq = conv.reshape(b, g, l)
        pos = unit["pos"]
        hid = seq + pos[None]
        ms = jnp.mean(hid * hid, axis=1, keepdims=True)
        normed = hid * jax.lax.rsqrt(ms + RMS_EPS) * unit["rms_w"][None]
        out = normed + pos[None] + seq
        stack.append(out.reshape(b, g, h, w))
    return jnp.concatenate(stack, axis=1)


if __name__ == "__main__":
    B, CIN, H, W = 2, 4, 16, 16
    UNITS, GROWTH = 2, 8

    key = jax.random.PRNGKey(0)
    kx, kp = jax.random.split(key)
    x = jax.random.normal(kx, (B, CIN, H, W), dtype=jnp.float32)
    params = init_params(kp, CIN, UNITS, GROWTH, H * W)
    masks = build_tap_masks(H, W)

    fwd = jax.jit(lambda inp: dense_feature_stack_forward(inp, params, masks))
    out = fwd(x)
    jax.block_until_ready(out)

    ref = _reference_forward(x, params, H, W)
    max_err = float(jnp.max(jnp.abs(out - ref)))

    assert out.shape == (B, CIN + UNITS * GROWTH, H, W), out.shape
    assert out.dtype == jnp.float32
    assert max_err < 2e-2, max_err
    print("KERNEL_OK")
</pallas_src>

<mosaic_0001>
module attributes {stable_mosaic.version = 11 : i64} {
  func.func @_dense_unit_kernel(%arg0: i32, %arg1: memref<1x8x256xf32, #tpu.memory_space<vmem>>, %arg2: memref<8x1xf32, #tpu.memory_space<vmem>>, %arg3: memref<8x1xf32, #tpu.memory_space<vmem>>, %arg4: memref<8x72xbf16, #tpu.memory_space<vmem>>, %arg5: memref<8x1xf32, #tpu.memory_space<vmem>>, %arg6: memref<9x1x256xf32, #tpu.memory_space<vmem>>, %arg7: memref<8x256xf32, #tpu.memory_space<vmem>>, %arg8: memref<8x1xf32, #tpu.memory_space<vmem>>, %arg9: memref<1x8x256xf32, #tpu.memory_space<vmem>>) attributes {dimension_semantics = [#tpu.dimension_semantics<parallel>], iteration_bounds = array<i64: 2>, scalar_prefetch = 0 : i64, scratch_operands = 0 : i64, tpu.core_type = #tpu.core_type<tc>, window_params = [{transform_indices = @transform_0, window_bounds = array<i64: 1, 8, 256>}, {pipeline_mode = #tpu.pipeline_mode<synchronous>, transform_indices = @transform_1, window_bounds = array<i64: 8, 1>}, {pipeline_mode = #tpu.pipeline_mode<synchronous>, transform_indices = @transform_2, window_bounds = array<i64: 8, 1>}, {pipeline_mode = #tpu.pipeline_mode<synchronous>, transform_indices = @transform_3, window_bounds = array<i64: 8, 72>}, {pipeline_mode = #tpu.pipeline_mode<synchronous>, transform_indices = @transform_4, window_bounds = array<i64: 8, 1>}, {pipeline_mode = #tpu.pipeline_mode<synchronous>, transform_indices = @transform_5, window_bounds = array<i64: 9, 1, 256>}, {pipeline_mode = #tpu.pipeline_mode<synchronous>, transform_indices = @transform_6, window_bounds = array<i64: 8, 256>}, {pipeline_mode = #tpu.pipeline_mode<synchronous>, transform_indices = @transform_7, window_bounds = array<i64: 8, 1>}, {transform_indices = @transform_8, window_bounds = array<i64: 1, 8, 256>}]} {
    %c0 = arith.constant 0 : index
    %c0_0 = arith.constant 0 : index
    %c0_1 = arith.constant 0 : index
    %0 = vector.load %arg1[%c0, %c0_0, %c0_1] : memref<1x8x256xf32, #tpu.memory_space<vmem>>, vector<1x8x256xf32>
    %1 = vector.shape_cast %0 : vector<1x8x256xf32> to vector<8x256xf32>
    %c0_2 = arith.constant 0 : index
    %c0_3 = arith.constant 0 : index
    %2 = vector.load %arg2[%c0_2, %c0_3] : memref<8x1xf32, #tpu.memory_space<vmem>>, vector<8x1xf32>
    %3 = vector.broadcast %2 : vector<8x1xf32> to vector<8x256xf32>
    %4 = arith.mulf %1, %3 : vector<8x256xf32>
    %c0_4 = arith.constant 0 : index
    %c0_5 = arith.constant 0 : index
    %5 = vector.load %arg3[%c0_4, %c0_5] : memref<8x1xf32, #tpu.memory_space<vmem>>, vector<8x1xf32>
    %6 = vector.broadcast %5 : vector<8x1xf32> to vector<8x256xf32>
    %7 = arith.addf %4, %6 : vector<8x256xf32>
    %cst = arith.constant 0.000000e+00 : f32
    %8 = vector.broadcast %cst : f32 to vector<8x256xf32>
    %9 = arith.maximumf %7, %8 : vector<8x256xf32>
    %c17_i32 = arith.constant 17 : i32
    %10 = tpu.dynamic_rotate %9 by %c17_i32 dim 1 : vector<8x256xf32>, i32 -> vector<8x256xf32>
    %c0_6 = arith.constant 0 : index
    %c0_7 = arith.constant 0 : index
    %c0_8 = arith.constant 0 : index
    %11 = vector.load %arg6[%c0_6, %c0_7, %c0_8] : memref<9x1x256xf32, #tpu.memory_space<vmem>>, vector<1x1x256xf32>
    %12 = vector.shape_cast %11 : vector<1x1x256xf32> to vector<1x256xf32>
    %13 = vector.broadcast %12 : vector<1x256xf32> to vector<8x256xf32>
    %14 = arith.mulf %10, %13 : vector<8x256xf32>
    %c16_i32 = arith.constant 16 : i32
    %15 = tpu.dynamic_rotate %9 by %c16_i32 dim 1 : vector<8x256xf32>, i32 -> vector<8x256xf32>
    %c1 = arith.constant 1 : index
    %c0_9 = arith.constant 0 : index
    %c0_10 = arith.constant 0 : index
    %16 = vector.load %arg6[%c1, %c0_9, %c0_10] : memref<9x1x256xf32, #tpu.memory_space<vmem>>, vector<1x1x256xf32>
    %17 = vector.shape_cast %16 : vector<1x1x256xf32> to vector<1x256xf32>
    %18 = vector.broadcast %17 : vector<1x256xf32> to vector<8x256xf32>
    %19 = arith.mulf %15, %18 : vector<8x256xf32>
    %c15_i32 = arith.constant 15 : i32
    %20 = tpu.dynamic_rotate %9 by %c15_i32 dim 1 : vector<8x256xf32>, i32 -> vector<8x256xf32>
    %c2 = arith.constant 2 : index
    %c0_11 = arith.constant 0 : index
    %c0_12 = arith.constant 0 : index
    %21 = vector.load %arg6[%c2, %c0_11, %c0_12] : memref<9x1x256xf32, #tpu.memory_space<vmem>>, vector<1x1x256xf32>
    %22 = vector.shape_cast %21 : vector<1x1x256xf32> to vector<1x256xf32>
    %23 = vector.broadcast %22 : vector<1x256xf32> to vector<8x256xf32>
    %24 = arith.mulf %20, %23 : vector<8x256xf32>
    %c1_i32 = arith.constant 1 : i32
    %25 = tpu.dynamic_rotate %9 by %c1_i32 dim 1 : vector<8x256xf32>, i32 -> vector<8x256xf32>
    %c3 = arith.constant 3 : index
    %c0_13 = arith.constant 0 : index
    %c0_14 = arith.constant 0 : index
    %26 = vector.load %arg6[%c3, %c0_13, %c0_14] : memref<9x1x256xf32, #tpu.memory_space<vmem>>, vector<1x1x256xf32>
    %27 = vector.shape_cast %26 : vector<1x1x256xf32> to vector<1x256xf32>
    %28 = vector.broadcast %27 : vector<1x256xf32> to vector<8x256xf32>
    %29 = arith.mulf %25, %28 : vector<8x256xf32>
    %c4 = arith.constant 4 : index
    %c0_15 = arith.constant 0 : index
    %c0_16 = arith.constant 0 : index
    %30 = vector.load %arg6[%c4, %c0_15, %c0_16] : memref<9x1x256xf32, #tpu.memory_space<vmem>>, vector<1x1x256xf32>
    %31 = vector.shape_cast %30 : vector<1x1x256xf32> to vector<1x256xf32>
    %32 = vector.broadcast %31 : vector<1x256xf32> to vector<8x256xf32>
    %33 = arith.mulf %9, %32 : vector<8x256xf32>
    %c255_i32 = arith.constant 255 : i32
    %34 = tpu.dynamic_rotate %9 by %c255_i32 dim 1 : vector<8x256xf32>, i32 -> vector<8x256xf32>
    %c5 = arith.constant 5 : index
    %c0_17 = arith.constant 0 : index
    %c0_18 = arith.constant 0 : index
    %35 = vector.load %arg6[%c5, %c0_17, %c0_18] : memref<9x1x256xf32, #tpu.memory_space<vmem>>, vector<1x1x256xf32>
    %36 = vector.shape_cast %35 : vector<1x1x256xf32> to vector<1x256xf32>
    %37 = vector.broadcast %36 : vector<1x256xf32> to vector<8x256xf32>
    %38 = arith.mulf %34, %37 : vector<8x256xf32>
    %c241_i32 = arith.constant 241 : i32
    %39 = tpu.dynamic_rotate %9 by %c241_i32 dim 1 : vector<8x256xf32>, i32 -> vector<8x256xf32>
    %c6 = arith.constant 6 : index
    %c0_19 = arith.constant 0 : index
    %c0_20 = arith.constant 0 : index
    %40 = vector.load %arg6[%c6, %c0_19, %c0_20] : memref<9x1x256xf32, #tpu.memory_space<vmem>>, vector<1x1x256xf32>
    %41 = vector.shape_cast %40 : vector<1x1x256xf32> to vector<1x256xf32>
    %42 = vector.broadcast %41 : vector<1x256xf32> to vector<8x256xf32>
    %43 = arith.mulf %39, %42 : vector<8x256xf32>
    %c240_i32 = arith.constant 240 : i32
    %44 = tpu.dynamic_rotate %9 by %c240_i32 dim 1 : vector<8x256xf32>, i32 -> vector<8x256xf32>
    %c7 = arith.constant 7 : index
    %c0_21 = arith.constant 0 : index
    %c0_22 = arith.constant 0 : index
    %45 = vector.load %arg6[%c7, %c0_21, %c0_22] : memref<9x1x256xf32, #tpu.memory_space<vmem>>, vector<1x1x256xf32>
    %46 = vector.shape_cast %45 : vector<1x1x256xf32> to vector<1x256xf32>
    %47 = vector.broadcast %46 : vector<1x256xf32> to vector<8x256xf32>
    %48 = arith.mulf %44, %47 : vector<8x256xf32>
    %c239_i32 = arith.constant 239 : i32
    %49 = tpu.dynamic_rotate %9 by %c239_i32 dim 1 : vector<8x256xf32>, i32 -> vector<8x256xf32>
    %c8 = arith.constant 8 : index
    %c0_23 = arith.constant 0 : index
    %c0_24 = arith.constant 0 : index
    %50 = vector.load %arg6[%c8, %c0_23, %c0_24] : memref<9x1x256xf32, #tpu.memory_space<vmem>>, vector<1x1x256xf32>
    %51 = vector.shape_cast %50 : vector<1x1x256xf32> to vector<1x256xf32>
    %52 = vector.broadcast %51 : vector<1x256xf32> to vector<8x256xf32>
    %53 = arith.mulf %49, %52 : vector<8x256xf32>
    %54 = tpu.concatenate %14, %19, %24, %29, %33, %38, %43, %48, %53 in 0 : vector<8x256xf32>, vector<8x256xf32>, vector<8x256xf32>, vector<8x256xf32>, vector<8x256xf32>, vector<8x256xf32>, vector<8x256xf32>, vector<8x256xf32>, vector<8x256xf32> -> vector<72x256xf32>
    %55 = arith.truncf %54 : vector<72x256xf32> to vector<72x256xbf16>
    %c0_25 = arith.constant 0 : index
    %c0_26 = arith.constant 0 : index
    %56 = vector.load %arg4[%c0_25, %c0_26] : memref<8x72xbf16, #tpu.memory_space<vmem>>, vector<8x72xbf16>
    %cst_27 = arith.constant dense<0.000000e+00> : vector<8x256xf32>
    %57 = tpu.matmul %56, %55, %cst_27 {dimension_numbers = #tpu.dot_dimension_numbers<[1], [0], [0], [1], [0, 0, 1, 1], [], []>} : vector<8x72xbf16>, vector<72x256xbf16>, vector<8x256xf32> -> vector<8x256xf32>
    %c0_28 = arith.constant 0 : index
    %c0_29 = arith.constant 0 : index
    %58 = vector.load %arg5[%c0_28, %c0_29] : memref<8x1xf32, #tpu.memory_space<vmem>>, vector<8x1xf32>
    %59 = vector.broadcast %58 : vector<8x1xf32> to vector<8x256xf32>
    %60 = arith.addf %57, %59 : vector<8x256xf32>
    %c0_30 = arith.constant 0 : index
    %c0_31 = arith.constant 0 : index
    %61 = vector.load %arg7[%c0_30, %c0_31] : memref<8x256xf32, #tpu.memory_space<vmem>>, vector<8x256xf32>
    %62 = arith.addf %60, %61 : vector<8x256xf32>
    %63 = arith.mulf %62, %62 : vector<8x256xf32>
    %cst_32 = arith.constant dense<0.000000e+00> : vector<256xf32>
    %64 = vector.multi_reduction <add>, %63, %cst_32 [0] : vector<8x256xf32> to vector<256xf32>
    %65 = vector.shape_cast %64 : vector<256xf32> to vector<1x256xf32>
    %cst_33 = arith.constant 8.000000e+00 : f32
    %66 = vector.broadcast %cst_33 : f32 to vector<1x256xf32>
    %67 = arith.divf %65, %66 : vector<1x256xf32>
    %cst_34 = arith.constant 9.99999974E-6 : f32
    %68 = vector.broadcast %cst_34 : f32 to vector<1x256xf32>
    %69 = arith.addf %67, %68 : vector<1x256xf32>
    %70 = math.rsqrt %69 : vector<1x256xf32>
    %71 = vector.broadcast %70 : vector<1x256xf32> to vector<8x256xf32>
    %72 = arith.mulf %62, %71 : vector<8x256xf32>
    %c0_35 = arith.constant 0 : index
    %c0_36 = arith.constant 0 : index
    %73 = vector.load %arg8[%c0_35, %c0_36] : memref<8x1xf32, #tpu.memory_space<vmem>>, vector<8x1xf32>
    %74 = vector.broadcast %73 : vector<8x1xf32> to vector<8x256xf32>
    %75 = arith.mulf %72, %74 : vector<8x256xf32>
    %76 = arith.addf %75, %61 : vector<8x256xf32>
    %77 = arith.addf %76, %60 : vector<8x256xf32>
    %c0_37 = arith.constant 0 : index
    %c0_38 = arith.constant 0 : index
    %c0_39 = arith.constant 0 : index
    %78 = vector.load %arg9[%c0_37, %c0_38, %c0_39] : memref<1x8x256xf32, #tpu.memory_space<vmem>>, vector<1x8x256xf32>
    %79 = vector.shape_cast %78 : vector<1x8x256xf32> to vector<8x256xf32>
    %80 = vector.shape_cast %77 : vector<8x256xf32> to vector<1x8x256xf32>
    tpu.vector_store %arg9[%c0_37, %c0_38, %c0_39], %80 {strides = array<i32>} : memref<1x8x256xf32, #tpu.memory_space<vmem>>, vector<1x8x256xf32>,
    return
  }
  func.func @transform_0(%arg0: i32) -> (i32, i32, i32) {
    %c0_i32 = arith.constant 0 : i32
    %c0_i32_0 = arith.constant 0 : i32
    %c0_i32_1 = arith.constant 0 : i32
    return %arg0, %c0_i32, %c0_i32_0 : i32, i32, i32
  }
  func.func @transform_1(%arg0: i32) -> (i32, i32) {
    %c0_i32 = arith.constant 0 : i32
    %c0_i32_0 = arith.constant 0 : i32
    %c0_i32_1 = arith.constant 0 : i32
    return %c0_i32, %c0_i32_0 : i32, i32
  }
  func.func @transform_2(%arg0: i32) -> (i32, i32) {
    %c0_i32 = arith.constant 0 : i32
    %c0_i32_0 = arith.constant 0 : i32
    %c0_i32_1 = arith.constant 0 : i32
    return %c0_i32, %c0_i32_0 : i32, i32
  }
  func.func @transform_3(%arg0: i32) -> (i32, i32) {
    %c0_i32 = arith.constant 0 : i32
    %c0_i32_0 = arith.constant 0 : i32
    %c0_i32_1 = arith.constant 0 : i32
    return %c0_i32, %c0_i32_0 : i32, i32
  }
  func.func @transform_4(%arg0: i32) -> (i32, i32) {
    %c0_i32 = arith.constant 0 : i32
    %c0_i32_0 = arith.constant 0 : i32
    %c0_i32_1 = arith.constant 0 : i32
    return %c0_i32, %c0_i32_0 : i32, i32
  }
  func.func @transform_5(%arg0: i32) -> (i32, i32, i32) {
    %c0_i32 = arith.constant 0 : i32
    %c0_i32_0 = arith.constant 0 : i32
    %c0_i32_1 = arith.constant 0 : i32
    %c0_i32_2 = arith.constant 0 : i32
    return %c0_i32, %c0_i32_0, %c0_i32_1 : i32, i32, i32
  }
  func.func @transform_6(%arg0: i32) -> (i32, i32) {
    %c0_i32 = arith.constant 0 : i32
    %c0_i32_0 = arith.constant 0 : i32
    %c0_i32_1 = arith.constant 0 : i32
    return %c0_i32, %c0_i32_0 : i32, i32
  }
  func.func @transform_7(%arg0: i32) -> (i32, i32) {
    %c0_i32 = arith.constant 0 : i32
    %c0_i32_0 = arith.constant 0 : i32
    %c0_i32_1 = arith.constant 0 : i32
    return %c0_i32, %c0_i32_0 : i32, i32
  }
  func.func @transform_8(%arg0: i32) -> (i32, i32, i32) {
    %c0_i32 = arith.constant 0 : i32
    %c0_i32_0 = arith.constant 0 : i32
    %c0_i32_1 = arith.constant 0 : i32
    return %arg0, %c0_i32, %c0_i32_0 : i32, i32, i32
  }
}

module attributes {stable_mosaic.version = 11 : i64} {
  func.func @_dense_unit_kernel(%arg0: i32, %arg1: memref<1x16x256xf32, #tpu.memory_space<vmem>>, %arg2: memref<16x1xf32, #tpu.memory_space<vmem>>, %arg3: memref<16x1xf32, #tpu.memory_space<vmem>>, %arg4: memref<8x144xbf16, #tpu.memory_space<vmem>>, %arg5: memref<8x1xf32, #tpu.memory_space<vmem>>, %arg6: memref<9x1x256xf32, #tpu.memory_space<vmem>>, %arg7: memref<8x256xf32, #tpu.memory_space<vmem>>, %arg8: memref<8x1xf32, #tpu.memory_space<vmem>>, %arg9: memref<1x8x256xf32, #tpu.memory_space<vmem>>) attributes {dimension_semantics = [#tpu.dimension_semantics<parallel>], iteration_bounds = array<i64: 2>, scalar_prefetch = 0 : i64, scratch_operands = 0 : i64, tpu.core_type = #tpu.core_type<tc>, window_params = [{transform_indices = @transform_0, window_bounds = array<i64: 1, 16, 256>}, {pipeline_mode = #tpu.pipeline_mode<synchronous>, transform_indices = @transform_1, window_bounds = array<i64: 16, 1>}, {pipeline_mode = #tpu.pipeline_mode<synchronous>, transform_indices = @transform_2, window_bounds = array<i64: 16, 1>}, {pipeline_mode = #tpu.pipeline_mode<synchronous>, transform_indices = @transform_3, window_bounds = array<i64: 8, 144>}, {pipeline_mode = #tpu.pipeline_mode<synchronous>, transform_indices = @transform_4, window_bounds = array<i64: 8, 1>}, {pipeline_mode = #tpu.pipeline_mode<synchronous>, transform_indices = @transform_5, window_bounds = array<i64: 9, 1, 256>}, {pipeline_mode = #tpu.pipeline_mode<synchronous>, transform_indices = @transform_6, window_bounds = array<i64: 8, 256>}, {pipeline_mode = #tpu.pipeline_mode<synchronous>, transform_indices = @transform_7, window_bounds = array<i64: 8, 1>}, {transform_indices = @transform_8, window_bounds = array<i64: 1, 8, 256>}]} {
    %c0 = arith.constant 0 : index
    %c0_0 = arith.constant 0 : index
    %c0_1 = arith.constant 0 : index
    %0 = vector.load %arg1[%c0, %c0_0, %c0_1] : memref<1x16x256xf32, #tpu.memory_space<vmem>>, vector<1x16x256xf32>
    %1 = vector.shape_cast %0 : vector<1x16x256xf32> to vector<16x256xf32>
    %c0_2 = arith.constant 0 : index
    %c0_3 = arith.constant 0 : index
    %2 = vector.load %arg2[%c0_2, %c0_3] : memref<16x1xf32, #tpu.memory_space<vmem>>, vector<16x1xf32>
    %3 = vector.broadcast %2 : vector<16x1xf32> to vector<16x256xf32>
    %4 = arith.mulf %1, %3 : vector<16x256xf32>
    %c0_4 = arith.constant 0 : index
    %c0_5 = arith.constant 0 : index
    %5 = vector.load %arg3[%c0_4, %c0_5] : memref<16x1xf32, #tpu.memory_space<vmem>>, vector<16x1xf32>
    %6 = vector.broadcast %5 : vector<16x1xf32> to vector<16x256xf32>
    %7 = arith.addf %4, %6 : vector<16x256xf32>
    %cst = arith.constant 0.000000e+00 : f32
    %8 = vector.broadcast %cst : f32 to vector<16x256xf32>
    %9 = arith.maximumf %7, %8 : vector<16x256xf32>
    %c17_i32 = arith.constant 17 : i32
    %10 = tpu.dynamic_rotate %9 by %c17_i32 dim 1 : vector<16x256xf32>, i32 -> vector<16x256xf32>
    %c0_6 = arith.constant 0 : index
    %c0_7 = arith.constant 0 : index
    %c0_8 = arith.constant 0 : index
    %11 = vector.load %arg6[%c0_6, %c0_7, %c0_8] : memref<9x1x256xf32, #tpu.memory_space<vmem>>, vector<1x1x256xf32>
    %12 = vector.shape_cast %11 : vector<1x1x256xf32> to vector<1x256xf32>
    %13 = vector.broadcast %12 : vector<1x256xf32> to vector<16x256xf32>
    %14 = arith.mulf %10, %13 : vector<16x256xf32>
    %c16_i32 = arith.constant 16 : i32
    %15 = tpu.dynamic_rotate %9 by %c16_i32 dim 1 : vector<16x256xf32>, i32 -> vector<16x256xf32>
    %c1 = arith.constant 1 : index
    %c0_9 = arith.constant 0 : index
    %c0_10 = arith.constant 0 : index
    %16 = vector.load %arg6[%c1, %c0_9, %c0_10] : memref<9x1x256xf32, #tpu.memory_space<vmem>>, vector<1x1x256xf32>
    %17 = vector.shape_cast %16 : vector<1x1x256xf32> to vector<1x256xf32>
    %18 = vector.broadcast %17 : vector<1x256xf32> to vector<16x256xf32>
    %19 = arith.mulf %15, %18 : vector<16x256xf32>
    %c15_i32 = arith.constant 15 : i32
    %20 = tpu.dynamic_rotate %9 by %c15_i32 dim 1 : vector<16x256xf32>, i32 -> vector<16x256xf32>
    %c2 = arith.constant 2 : index
    %c0_11 = arith.constant 0 : index
    %c0_12 = arith.constant 0 : index
    %21 = vector.load %arg6[%c2, %c0_11, %c0_12] : memref<9x1x256xf32, #tpu.memory_space<vmem>>, vector<1x1x256xf32>
    %22 = vector.shape_cast %21 : vector<1x1x256xf32> to vector<1x256xf32>
    %23 = vector.broadcast %22 : vector<1x256xf32> to vector<16x256xf32>
    %24 = arith.mulf %20, %23 : vector<16x256xf32>
    %c1_i32 = arith.constant 1 : i32
    %25 = tpu.dynamic_rotate %9 by %c1_i32 dim 1 : vector<16x256xf32>, i32 -> vector<16x256xf32>
    %c3 = arith.constant 3 : index
    %c0_13 = arith.constant 0 : index
    %c0_14 = arith.constant 0 : index
    %26 = vector.load %arg6[%c3, %c0_13, %c0_14] : memref<9x1x256xf32, #tpu.memory_space<vmem>>, vector<1x1x256xf32>
    %27 = vector.shape_cast %26 : vector<1x1x256xf32> to vector<1x256xf32>
    %28 = vector.broadcast %27 : vector<1x256xf32> to vector<16x256xf32>
    %29 = arith.mulf %25, %28 : vector<16x256xf32>
    %c4 = arith.constant 4 : index
    %c0_15 = arith.constant 0 : index
    %c0_16 = arith.constant 0 : index
    %30 = vector.load %arg6[%c4, %c0_15, %c0_16] : memref<9x1x256xf32, #tpu.memory_space<vmem>>, vector<1x1x256xf32>
    %31 = vector.shape_cast %30 : vector<1x1x256xf32> to vector<1x256xf32>
    %32 = vector.broadcast %31 : vector<1x256xf32> to vector<16x256xf32>
    %33 = arith.mulf %9, %32 : vector<16x256xf32>
    %c255_i32 = arith.constant 255 : i32
    %34 = tpu.dynamic_rotate %9 by %c255_i32 dim 1 : vector<16x256xf32>, i32 -> vector<16x256xf32>
    %c5 = arith.constant 5 : index
    %c0_17 = arith.constant 0 : index
    %c0_18 = arith.constant 0 : index
    %35 = vector.load %arg6[%c5, %c0_17, %c0_18] : memref<9x1x256xf32, #tpu.memory_space<vmem>>, vector<1x1x256xf32>
    %36 = vector.shape_cast %35 : vector<1x1x256xf32> to vector<1x256xf32>
    %37 = vector.broadcast %36 : vector<1x256xf32> to vector<16x256xf32>
    %38 = arith.mulf %34, %37 : vector<16x256xf32>
    %c241_i32 = arith.constant 241 : i32
    %39 = tpu.dynamic_rotate %9 by %c241_i32 dim 1 : vector<16x256xf32>, i32 -> vector<16x256xf32>
    %c6 = arith.constant 6 : index
    %c0_19 = arith.constant 0 : index
    %c0_20 = arith.constant 0 : index
    %40 = vector.load %arg6[%c6, %c0_19, %c0_20] : memref<9x1x256xf32, #tpu.memory_space<vmem>>, vector<1x1x256xf32>
    %41 = vector.shape_cast %40 : vector<1x1x256xf32> to vector<1x256xf32>
    %42 = vector.broadcast %41 : vector<1x256xf32> to vector<16x256xf32>
    %43 = arith.mulf %39, %42 : vector<16x256xf32>
    %c240_i32 = arith.constant 240 : i32
    %44 = tpu.dynamic_rotate %9 by %c240_i32 dim 1 : vector<16x256xf32>, i32 -> vector<16x256xf32>
    %c7 = arith.constant 7 : index
    %c0_21 = arith.constant 0 : index
    %c0_22 = arith.constant 0 : index
    %45 = vector.load %arg6[%c7, %c0_21, %c0_22] : memref<9x1x256xf32, #tpu.memory_space<vmem>>, vector<1x1x256xf32>
    %46 = vector.shape_cast %45 : vector<1x1x256xf32> to vector<1x256xf32>
    %47 = vector.broadcast %46 : vector<1x256xf32> to vector<16x256xf32>
    %48 = arith.mulf %44, %47 : vector<16x256xf32>
    %c239_i32 = arith.constant 239 : i32
    %49 = tpu.dynamic_rotate %9 by %c239_i32 dim 1 : vector<16x256xf32>, i32 -> vector<16x256xf32>
    %c8 = arith.constant 8 : index
    %c0_23 = arith.constant 0 : index
    %c0_24 = arith.constant 0 : index
    %50 = vector.load %arg6[%c8, %c0_23, %c0_24] : memref<9x1x256xf32, #tpu.memory_space<vmem>>, vector<1x1x256xf32>
    %51 = vector.shape_cast %50 : vector<1x1x256xf32> to vector<1x256xf32>
    %52 = vector.broadcast %51 : vector<1x256xf32> to vector<16x256xf32>
    %53 = arith.mulf %49, %52 : vector<16x256xf32>
    %54 = tpu.concatenate %14, %19, %24, %29, %33, %38, %43, %48, %53 in 0 : vector<16x256xf32>, vector<16x256xf32>, vector<16x256xf32>, vector<16x256xf32>, vector<16x256xf32>, vector<16x256xf32>, vector<16x256xf32>, vector<16x256xf32>, vector<16x256xf32> -> vector<144x256xf32>
    %55 = arith.truncf %54 : vector<144x256xf32> to vector<144x256xbf16>
    %c0_25 = arith.constant 0 : index
    %c0_26 = arith.constant 0 : index
    %56 = vector.load %arg4[%c0_25, %c0_26] : memref<8x144xbf16, #tpu.memory_space<vmem>>, vector<8x144xbf16>
    %cst_27 = arith.constant dense<0.000000e+00> : vector<8x256xf32>
    %57 = tpu.matmul %56, %55, %cst_27 {dimension_numbers = #tpu.dot_dimension_numbers<[1], [0], [0], [1], [0, 0, 1, 1], [], []>} : vector<8x144xbf16>, vector<144x256xbf16>, vector<8x256xf32> -> vector<8x256xf32>
    %c0_28 = arith.constant 0 : index
    %c0_29 = arith.constant 0 : index
    %58 = vector.load %arg5[%c0_28, %c0_29] : memref<8x1xf32, #tpu.memory_space<vmem>>, vector<8x1xf32>
    %59 = vector.broadcast %58 : vector<8x1xf32> to vector<8x256xf32>
    %60 = arith.addf %57, %59 : vector<8x256xf32>
    %c0_30 = arith.constant 0 : index
    %c0_31 = arith.constant 0 : index
    %61 = vector.load %arg7[%c0_30, %c0_31] : memref<8x256xf32, #tpu.memory_space<vmem>>, vector<8x256xf32>
    %62 = arith.addf %60, %61 : vector<8x256xf32>
    %63 = arith.mulf %62, %62 : vector<8x256xf32>
    %cst_32 = arith.constant dense<0.000000e+00> : vector<256xf32>
    %64 = vector.multi_reduction <add>, %63, %cst_32 [0] : vector<8x256xf32> to vector<256xf32>
    %65 = vector.shape_cast %64 : vector<256xf32> to vector<1x256xf32>
    %cst_33 = arith.constant 8.000000e+00 : f32
    %66 = vector.broadcast %cst_33 : f32 to vector<1x256xf32>
    %67 = arith.divf %65, %66 : vector<1x256xf32>
    %cst_34 = arith.constant 9.99999974E-6 : f32
    %68 = vector.broadcast %cst_34 : f32 to vector<1x256xf32>
    %69 = arith.addf %67, %68 : vector<1x256xf32>
    %70 = math.rsqrt %69 : vector<1x256xf32>
    %71 = vector.broadcast %70 : vector<1x256xf32> to vector<8x256xf32>
    %72 = arith.mulf %62, %71 : vector<8x256xf32>
    %c0_35 = arith.constant 0 : index
    %c0_36 = arith.constant 0 : index
    %73 = vector.load %arg8[%c0_35, %c0_36] : memref<8x1xf32, #tpu.memory_space<vmem>>, vector<8x1xf32>
    %74 = vector.broadcast %73 : vector<8x1xf32> to vector<8x256xf32>
    %75 = arith.mulf %72, %74 : vector<8x256xf32>
    %76 = arith.addf %75, %61 : vector<8x256xf32>
    %77 = arith.addf %76, %60 : vector<8x256xf32>
    %c0_37 = arith.constant 0 : index
    %c0_38 = arith.constant 0 : index
    %c0_39 = arith.constant 0 : index
    %78 = vector.load %arg9[%c0_37, %c0_38, %c0_39] : memref<1x8x256xf32, #tpu.memory_space<vmem>>, vector<1x8x256xf32>
    %79 = vector.shape_cast %78 : vector<1x8x256xf32> to vector<8x256xf32>
    %80 = vector.shape_cast %77 : vector<8x256xf32> to vector<1x8x256xf32>
    tpu.vector_store %arg9[%c0_37, %c0_38, %c0_39], %80 {strides = array<i32>} : memref<1x8x256xf32, #tpu.memory_space<vmem>>, vector<1x8x256xf32>,
    return
  }
  func.func @transform_0(%arg0: i32) -> (i32, i32, i32) {
    %c0_i32 = arith.constant 0 : i32
    %c0_i32_0 = arith.constant 0 : i32
    %c0_i32_1 = arith.constant 0 : i32
    return %arg0, %c0_i32, %c0_i32_0 : i32, i32, i32
  }
  func.func @transform_1(%arg0: i32) -> (i32, i32) {
    %c0_i32 = arith.constant 0 : i32
    %c0_i32_0 = arith.constant 0 : i32
    %c0_i32_1 = arith.constant 0 : i32
    return %c0_i32, %c0_i32_0 : i32, i32
  }
  func.func @transform_2(%arg0: i32) -> (i32, i32) {
    %c0_i32 = arith.constant 0 : i32
    %c0_i32_0 = arith.constant 0 : i32
    %c0_i32_1 = arith.constant 0 : i32
    return %c0_i32, %c0_i32_0 : i32, i32
  }
  func.func @transform_3(%arg0: i32) -> (i32, i32) {
    %c0_i32 = arith.constant 0 : i32
    %c0_i32_0 = arith.constant 0 : i32
    %c0_i32_1 = arith.constant 0 : i32
    return %c0_i32, %c0_i32_0 : i32, i32
  }
  func.func @transform_4(%arg0: i32) -> (i32, i32) {
    %c0_i32 = arith.constant 0 : i32
    %c0_i32_0 = arith.constant 0 : i32
    %c0_i32_1 = arith.constant 0 : i32
    return %c0_i32, %c0_i32_0 : i32, i32
  }
  func.func @transform_5(%arg0: i32) -> (i32, i32, i32) {
    %c0_i32 = arith.constant 0 : i32
    %c0_i32_0 = arith.constant 0 : i32
    %c0_i32_1 = arith.constant 0 : i32
    %c0_i32_2 = arith.constant 0 : i32
    return %c0_i32, %c0_i32_0, %c0_i32_1 : i32, i32, i32
  }
  func.func @transform_6(%arg0: i32) -> (i32, i32) {
    %c0_i32 = arith.constant 0 : i32
    %c0_i32_0 = arith.constant 0 : i32
    %c0_i32_1 = arith.constant 0 : i32
    return %c0_i32, %c0_i32_0 : i32, i32
  }
  func.func @transform_7(%arg0: i32) -> (i32, i32) {
    %c0_i32 = arith.constant 0 : i32
    %c0_i32_0 = arith.constant 0 : i32
    %c0_i32_1 = arith.constant 0 : i32
    return %c0_i32, %c0_i32_0 : i32, i32
  }
  func.func @transform_8(%arg0: i32) -> (i32, i32, i32) {
    %c0_i32 = arith.constant 0 : i32
    %c0_i32_0 = arith.constant 0 : i32
    %c0_i32_1 = arith.constant 0 : i32
    return %arg0, %c0_i32, %c0_i32_0 : i32, i32, i32
  }
}

</mosaic_0001>

<llo_original>
// kernel: _lambda_.3
$region0: #{_lambda_.3}
  #allocation0 [shape = 'u32[]', space=smem, size = 0x4, offset = 0x4, fixed_abs, tag = 'smem constant byte address 0x4 - core index']
  #allocation1 [shape = 'u32[144,128]{1,0:T(1,128)}', space=vmem, size = 0x12000, scoped, tag = 'internal scratch']
  %s0 = inlined_call_operand.vmem [shape: f32[2,16,256], index: 0, kind: input, shape index: {}]
  %s1 = inlined_call_operand.vmem [shape: f32[16,1], index: 1, kind: input, shape index: {}]
  %s2 = inlined_call_operand.vmem [shape: f32[16,1], index: 2, kind: input, shape index: {}]
  %s3 = inlined_call_operand.vmem [shape: bf16[8,144], index: 3, kind: input, shape index: {}]
  %s4 = inlined_call_operand.vmem [shape: f32[8,1], index: 4, kind: input, shape index: {}]
  %s5 = inlined_call_operand.vmem [shape: f32[9,1,256], index: 5, kind: input, shape index: {}]
  %s6 = inlined_call_operand.vmem [shape: f32[8,256], index: 6, kind: input, shape index: {}]
  %s7 = inlined_call_operand.vmem [shape: f32[8,1], index: 7, kind: input, shape index: {}]
  %s8 = inlined_call_operand.vmem [shape: f32[2,8,256], index: 8, kind: output, shape index: {}]
  %s9 = sld [smem:[#allocation0]]
  $region65: #{_lambda_.3} parent=0
    _
  %s11 = ssub.s32 1, %s9
  %s12 = scalar_select 0, %s11, %s9
  loop: start=0, step=1, limit=4
  $region2: #{_lambda_.3} parent=0 // loop_pre_header
    _
  $region3: #{_lambda_.3} parent=0 // loop_header
    %s14 = sphi 0, %s18
    %p15 = scmp.ge.s32.totalorder %s14, 4
    %s24 = sphi 0, %s26
    %s27 = sphi 0, %s24
    %s28 = sphi 0, %s27
    %s44 = sphi 0, %s28
    %s48 = sphi 0, %s48
    %s50 = sphi 0, %s48
    %s51 = sphi 0, %s50
    %s65 = sphi 0, %s51
    %s69 = sphi 0, %s69
    %s71 = sphi 0, %s69
    %s72 = sphi 0, %s71
    %s86 = sphi 0, %s72
    %s90 = sphi 0, %s90
    %s92 = sphi 0, %s90
    %s93 = sphi 0, %s92
    %s107 = sphi 0, %s93
    %s111 = sphi 0, %s111
    %s113 = sphi 0, %s111
    %s114 = sphi 0, %s113
    %s128 = sphi 0, %s114
    %s132 = sphi 0, %s132
    %s134 = sphi 0, %s132
    %s135 = sphi 0, %s134
    %s149 = sphi 0, %s135
    %s153 = sphi 0, %s153
    %s155 = sphi 0, %s153
    %s156 = sphi 0, %s155
    %s170 = sphi 0, %s156
    %s174 = sphi 0, %s174
    %s176 = sphi 0, %s174
    %s177 = sphi 0, %s176
    %s191 = sphi 0, %s177
    %s197 = sphi 0, %s199
    %s200 = sphi 0, %s197
    %s201 = sphi 0, %s200
    %s217 = sphi 0, %s201
  $region4: #{_lambda_.3} parent=0 // loop_header_branch
    %17 = sbr.rel (%p15) target = $region8
  $region5: #{_lambda_.3} parent=0 // loop_body
    %s19 = ssub.s32 %s14, 1
    %s20 = ssub.s32 %s14, 2
    %s21 = sadd.s32 %s14, 1
    %s22 = ssub.s32 %s14, %s21
    %p23 = scmp.eq.s32.totalorder %s22, 0
    %s25 = sadd.s32 %s24, 1
    %s26 = scalar_select %p23, %s24, %s25
    %p29 = pneg %p23
    %p30 = scmp.eq.s32.totalorder %s14, 1
    %p31 = por %p29, %p30
    %p32 = scmp.ne.s32.totalorder %s24, %s27
    %p33 = scmp.eq.s32.totalorder %s14, 0
    %p34 = por %p32, %p33
    %p35 = scmp.ne.s32.totalorder %s24, %s27
    %p36 = scmp.eq.s32.totalorder %s19, 1
    %p37 = por %p35, %p36
    %p38 = scmp.ne.s32.totalorder %s27, %s28
    %p39 = scmp.eq.s32.totalorder %s19, 0
    %p40 = por %p38, %p39
    %p41 = scmp.ne.s32.totalorder %s27, %s28
    %p42 = scmp.eq.s32.totalorder %s20, 1
    %p43 = por %p41, %p42
    %p45 = scmp.ne.s32.totalorder %s28, %s44
    %p46 = scmp.eq.s32.totalorder %s20, 0
    %p47 = por %p45, %p46
    %s49 = sadd.s32 %s48, 1
    %p52 = scmp.eq.s32.totalorder %s14, 1
    %p53 = scmp.ne.s32.totalorder %s48, %s50
    %p54 = scmp.eq.s32.totalorder %s14, 0
    %p55 = por %p53, %p54
    %p56 = scmp.ne.s32.totalorder %s48, %s50
    %p57 = scmp.eq.s32.totalorder %s19, 1
    %p58 = por %p56, %p57
    %p59 = scmp.ne.s32.totalorder %s50, %s51
    %p60 = scmp.eq.s32.totalorder %s19, 0
    %p61 = por %p59, %p60
    %p62 = scmp.ne.s32.totalorder %s50, %s51
    %p63 = scmp.eq.s32.totalorder %s20, 1
    %p64 = por %p62, %p63
    %p66 = scmp.ne.s32.totalorder %s51, %s65
    %p67 = scmp.eq.s32.totalorder %s20, 0
    %p68 = por %p66, %p67
    %s70 = sadd.s32 %s69, 1
    %p73 = scmp.eq.s32.totalorder %s14, 1
    %p74 = scmp.ne.s32.totalorder %s69, %s71
    %p75 = scmp.eq.s32.totalorder %s14, 0
    %p76 = por %p74, %p75
    %p77 = scmp.ne.s32.totalorder %s69, %s71
    %p78 = scmp.eq.s32.totalorder %s19, 1
    %p79 = por %p77, %p78
    %p80 = scmp.ne.s32.totalorder %s71, %s72
    %p81 = scmp.eq.s32.totalorder %s19, 0
    %p82 = por %p80, %p81
    %p83 = scmp.ne.s32.totalorder %s71, %s72
    %p84 = scmp.eq.s32.totalorder %s20, 1
    %p85 = por %p83, %p84
    %p87 = scmp.ne.s32.totalorder %s72, %s86
    %p88 = scmp.eq.s32.totalorder %s20, 0
    %p89 = por %p87, %p88
    %s91 = sadd.s32 %s90, 1
    %p94 = scmp.eq.s32.totalorder %s14, 1
    %p95 = scmp.ne.s32.totalorder %s90, %s92
    %p96 = scmp.eq.s32.totalorder %s14, 0
    %p97 = por %p95, %p96
    %p98 = scmp.ne.s32.totalorder %s90, %s92
    %p99 = scmp.eq.s32.totalorder %s19, 1
    %p100 = por %p98, %p99
    %p101 = scmp.ne.s32.totalorder %s92, %s93
    %p102 = scmp.eq.s32.totalorder %s19, 0
    %p103 = por %p101, %p102
    %p104 = scmp.ne.s32.totalorder %s92, %s93
    %p105 = scmp.eq.s32.totalorder %s20, 1
    %p106 = por %p104, %p105
    %p108 = scmp.ne.s32.totalorder %s93, %s107
    %p109 = scmp.eq.s32.totalorder %s20, 0
    %p110 = por %p108, %p109
    %s112 = sadd.s32 %s111, 1
    %p115 = scmp.eq.s32.totalorder %s14, 1
    %p116 = scmp.ne.s32.totalorder %s111, %s113
    %p117 = scmp.eq.s32.totalorder %s14, 0
    %p118 = por %p116, %p117
    %p119 = scmp.ne.s32.totalorder %s111, %s113
    %p120 = scmp.eq.s32.totalorder %s19, 1
    %p121 = por %p119, %p120
    %p122 = scmp.ne.s32.totalorder %s113, %s114
    %p123 = scmp.eq.s32.totalorder %s19, 0
    %p124 = por %p122, %p123
    %p125 = scmp.ne.s32.totalorder %s113, %s114
    %p126 = scmp.eq.s32.totalorder %s20, 1
    %p127 = por %p125, %p126
    %p129 = scmp.ne.s32.totalorder %s114, %s128
    %p130 = scmp.eq.s32.totalorder %s20, 0
    %p131 = por %p129, %p130
    %s133 = sadd.s32 %s132, 1
    %p136 = scmp.eq.s32.totalorder %s14, 1
    %p137 = scmp.ne.s32.totalorder %s132, %s134
    %p138 = scmp.eq.s32.totalorder %s14, 0
    %p139 = por %p137, %p138
    %p140 = scmp.ne.s32.totalorder %s132, %s134
    %p141 = scmp.eq.s32.totalorder %s19, 1
    %p142 = por %p140, %p141
    %p143 = scmp.ne.s32.totalorder %s134, %s135
    %p144 = scmp.eq.s32.totalorder %s19, 0
    %p145 = por %p143, %p144
    %p146 = scmp.ne.s32.totalorder %s134, %s135
    %p147 = scmp.eq.s32.totalorder %s20, 1
    %p148 = por %p146, %p147
    %p150 = scmp.ne.s32.totalorder %s135, %s149
    %p151 = scmp.eq.s32.totalorder %s20, 0
    %p152 = por %p150, %p151
    %s154 = sadd.s32 %s153, 1
    %p157 = scmp.eq.s32.totalorder %s14, 1
    %p158 = scmp.ne.s32.totalorder %s153, %s155
    %p159 = scmp.eq.s32.totalorder %s14, 0
    %p160 = por %p158, %p159
    %p161 = scmp.ne.s32.totalorder %s153, %s155
    %p162 = scmp.eq.s32.totalorder %s19, 1
    %p163 = por %p161, %p162
    %p164 = scmp.ne.s32.totalorder %s155, %s156
    %p165 = scmp.eq.s32.totalorder %s19, 0
    %p166 = por %p164, %p165
    %p167 = scmp.ne.s32.totalorder %s155, %s156
    %p168 = scmp.eq.s32.totalorder %s20, 1
    %p169 = por %p167, %p168
    %p171 = scmp.ne.s32.totalorder %s156, %s170
    %p172 = scmp.eq.s32.totalorder %s20, 0
    %p173 = por %p171, %p172
    %s175 = sadd.s32 %s174, 1
    %p178 = scmp.eq.s32.totalorder %s14, 1
    %p179 = scmp.ne.s32.totalorder %s174, %s176
    %p180 = scmp.eq.s32.totalorder %s14, 0
    %p181 = por %p179, %p180
    %p182 = scmp.ne.s32.totalorder %s174, %s176
    %p183 = scmp.eq.s32.totalorder %s19, 1
    %p184 = por %p182, %p183
    %p185 = scmp.ne.s32.totalorder %s176, %s177
    %p186 = scmp.eq.s32.totalorder %s19, 0
    %p187 = por %p185, %p186
    %p188 = scmp.ne.s32.totalorder %s176, %s177
    %p189 = scmp.eq.s32.totalorder %s20, 1
    %p190 = por %p188, %p189
    %p192 = scmp.ne.s32.totalorder %s177, %s191
    %p193 = scmp.eq.s32.totalorder %s20, 0
    %p194 = por %p192, %p193
    %s195 = ssub.s32 %s14, %s21
    %p196 = scmp.eq.s32.totalorder %s195, 0
    %s198 = sadd.s32 %s197, 1
    %s199 = scalar_select %p196, %s197, %s198
    %p202 = pneg %p196
    %p203 = scmp.eq.s32.totalorder %s14, 1
    %p204 = por %p202, %p203
    %p205 = scmp.ne.s32.totalorder %s197, %s200
    %p206 = scmp.eq.s32.totalorder %s14, 0
    %p207 = por %p205, %p206
    %p208 = scmp.ne.s32.totalorder %s197, %s200
    %p209 = scmp.eq.s32.totalorder %s19, 1
    %p210 = por %p208, %p209
    %p211 = scmp.ne.s32.totalorder %s200, %s201
    %p212 = scmp.eq.s32.totalorder %s19, 0
    %p213 = por %p211, %p212
    %p214 = scmp.ne.s32.totalorder %s200, %s201
    %p215 = scmp.eq.s32.totalorder %s20, 1
    %p216 = por %p214, %p215
    %p218 = scmp.ne.s32.totalorder %s201, %s217
    %p219 = scmp.eq.s32.totalorder %s20, 0
    %p220 = por %p218, %p219
    %p221 = scmp.le.s32.totalorder 1, %s14
    %p222 = scmp.lt.s32.totalorder %s14, 3
    %p223 = pnand %p221, %p222
    %p224 = pneg %p223
    // Predicated region
    $region9: #{_lambda_.3} parent=5 // pred_check
      _
    $region10: #{_lambda_.3} parent=5 // pred_check_branch
      %226 = sbr.rel (%p223) target = $region12
    $region11: #{_lambda_.3} parent=5 // pred_region
      %s227 = ssub.s32 %s14, 1
      // Predicated region
      $region13: #{_lambda_.3} parent=11 // pred_check
        %p228 = pneg %p61
      $region14: #{_lambda_.3} parent=11 // pred_check_branch
        %230 = sbr.rel (%p228) target = $region16
      $region15: #{_lambda_.3} parent=11 // pred_region
        _
      $region16: #{_lambda_.3} parent=11 // pred_fallthru
        _
      // Predicated region
      $region17: #{_lambda_.3} parent=11 // pred_check
        %p231 = pneg %p82
      $region18: #{_lambda_.3} parent=11 // pred_check_branch
        %233 = sbr.rel (%p231) target = $region20
      $region19: #{_lambda_.3} parent=11 // pred_region
        _
      $region20: #{_lambda_.3} parent=11 // pred_fallthru
        _
      // Predicated region
      $region21: #{_lambda_.3} parent=11 // pred_check
        %p234 = pneg %p103
      $region22: #{_lambda_.3} parent=11 // pred_check_branch
        %236 = sbr.rel (%p234) target = $region24
      $region23: #{_lambda_.3} parent=11 // pred_region
        _
      $region24: #{_lambda_.3} parent=11 // pred_fallthru
        _
      // Predicated region
      $region25: #{_lambda_.3} parent=11 // pred_check
        %p237 = pneg %p124
      $region26: #{_lambda_.3} parent=11 // pred_check_branch
        %239 = sbr.rel (%p237) target = $region28
      $region27: #{_lambda_.3} parent=11 // pred_region
        _
      $region28: #{_lambda_.3} parent=11 // pred_fallthru
        _
      // Predicated region
      $region29: #{_lambda_.3} parent=11 // pred_check
        %p240 = pneg %p145
      $region30: #{_lambda_.3} parent=11 // pred_check_branch
        %242 = sbr.rel (%p240) target = $region32
      $region31: #{_lambda_.3} parent=11 // pred_region
        _
      $region32: #{_lambda_.3} parent=11 // pred_fallthru
        _
      // Predicated region
      $region33: #{_lambda_.3} parent=11 // pred_check
        %p243 = pneg %p166
      $region34: #{_lambda_.3} parent=11 // pred_check_branch
        %245 = sbr.rel (%p243) target = $region36
      $region35: #{_lambda_.3} parent=11 // pred_region
        _
      $region36: #{_lambda_.3} parent=11 // pred_fallthru
        _
      // Predicated region
      $region37: #{_lambda_.3} parent=11 // pred_check
        %p246 = pneg %p187
      $region38: #{_lambda_.3} parent=11 // pred_check_branch
        %248 = sbr.rel (%p246) target = $region40
      $region39: #{_lambda_.3} parent=11 // pred_region
        _
      $region40: #{_lambda_.3} parent=11 // pred_fallthru
        _
    $region12: #{_lambda_.3} parent=5 // pred_fallthru
      _
    %p249 = scmp.lt.s32.totalorder %s14, 2
    // Predicated region
    $region41: #{_lambda_.3} parent=5 // pred_check
      %p250 = pneg %p249
    $region42: #{_lambda_.3} parent=5 // pred_check_branch
      %252 = sbr.rel (%p250) target = $region44
    $region43: #{_lambda_.3} parent=5 // pred_region
      // Predicated region
      $region45: #{_lambda_.3} parent=43 // pred_check
        %p253 = pneg %p34
      $region46: #{_lambda_.3} parent=43 // pred_check_branch
        %255 = sbr.rel (%p253) target = $region48
      $region47: #{_lambda_.3} parent=43 // pred_region
        %p256 = scmp.lt.s32.totalorder %s14, 1
        %s257 = scalar_select %p256, %s14, 1
        %s258 = smul.addr %s257, 4
        %s259 = smul.addr %s258, 8
        %s260 = scalar_lea.vmem %s0, %s259
      $region48: #{_lambda_.3} parent=43 // pred_fallthru
        _
    $region44: #{_lambda_.3} parent=5 // pred_fallthru
      _
    %p261 = scmp.le.s32.totalorder 1, %s14
    %p262 = scmp.lt.s32.totalorder %s14, 3
    %p263 = pnand %p261, %p262
    %p264 = pneg %p263
    // Predicated region
    $region49: #{_lambda_.3} parent=5 // pred_check
      _
    $region50: #{_lambda_.3} parent=5 // pred_check_branch
      %266 = sbr.rel (%p263) target = $region52
    $region51: #{_lambda_.3} parent=5 // pred_region
      %s267 = ssub.s32 %s14, 1
      %p268 = scmp.lt.s32.totalorder %s19, 1
      %s269 = scalar_select %p268, %s19, 1
      %s270 = smul.addr %s269, 4
      %s271 = smul.addr %s270, 8
      %s272 = scalar_lea.vmem %s0, %s271
      %p273 = pneg %p40
      %p274 = pneg %p37
      %p275 = pneg %p61
      %p276 = pneg %p58
      %p277 = pneg %p82
      %p278 = pneg %p79
      %p279 = pneg %p103
      %p280 = pneg %p100
      %p281 = pneg %p124
      %p282 = pneg %p121
      %p283 = pneg %p145
      %p284 = pneg %p142
      %p285 = pneg %p166
      %p286 = pneg %p163
      %p287 = pneg %p187
      %p288 = pneg %p184
      %p289 = pneg %p213
      %p290 = pneg %p210
      %p291 = scmp.lt.s32.totalorder %s19, 1
      %s292 = scalar_select %p291, %s19, 1
      %s293 = smul.addr %s292, 2
      %s294 = smul.addr %s293, 8
      %s295 = scalar_lea.vmem %s8, %s294
      %p296 = scmp.lt.s32.totalorder %s19, 1
      %s297 = scalar_select %p296, %s19, 1
      %s298 = smul.addr %s297, 4
      %s299 = smul.addr %s298, 8
      %s300 = scalar_lea.vmem %s0, %s299
      %p301 = scmp.lt.s32.totalorder %s19, 1
      %s302 = scalar_select %p301, %s19, 1
      %s303 = smul.addr %s302, 2
      %s304 = smul.addr %s303, 8
      %s305 = scalar_lea.vmem %s8, %s304
      %v307 = vld [vmem:[%s300] sm:$0xff]
      %v308 = vld [vmem:[%s300 + $0x8] sm:$0xff]
      %v309 = vld [vmem:[%s300 + $0x10] sm:$0xff]
      %v310 = vld [vmem:[%s300 + $0x18] sm:$0xff]
      %v311 = vld [vmem:[%s1] sm:$0xff]
      %v312 = vld [vmem:[%s1 + $0x8] sm:$0xff]
      %314 = vset.pattern.permute.xlu0 0
      %315 = vperm.xlu0 %314, %v311
      %v316 = vpop.permute.xlu0 %315
      %319 = vset.pattern.permute.xlu0 0
      %320 = vperm.xlu0 %319, %v312
      %v321 = vpop.permute.xlu0 %320
      %v323 = vmul.f32 %v307, %v316
      %v324 = vmul.f32 %v308, %v316
      %v325 = vmul.f32 %v309, %v321
      %v326 = vmul.f32 %v310, %v321
      %v327 = vld [vmem:[%s2] sm:$0xff]
      %v328 = vld [vmem:[%s2 + $0x8] sm:$0xff]
      %330 = vset.pattern.permute.xlu0 0
      %331 = vperm.xlu0 %330, %v327
      %v332 = vpop.permute.xlu0 %331
      %335 = vset.pattern.permute.xlu0 0
      %336 = vperm.xlu0 %335, %v328
      %v337 = vpop.permute.xlu0 %336
      %v339 = vadd.f32 %v323, %v332
      %v340 = vadd.f32 %v324, %v332
      %v341 = vadd.f32 %v325, %v337
      %v342 = vadd.f32 %v326, %v337
      %v343 = vmax.f32 %v339, 0.0
      %v344 = vmax.f32 %v340, 0.0
      %v345 = vmax.f32 %v341, 0.0
      %v346 = vmax.f32 %v342, 0.0
      %347 = vrot.lane.b32.xlu0 %v343, 17
      %v348 = vpop.permute.xlu0 %347
      %349 = vrot.lane.b32.xlu0 %v345, 17
      %v350 = vpop.permute.xlu0 %349
      %351 = vrot.lane.b32.xlu0 %v344, 17
      %v352 = vpop.permute.xlu0 %351
      %353 = vrot.lane.b32.xlu0 %v346, 17
      %v354 = vpop.permute.xlu0 %353
      %v355 = vlaneseq
      %v356 = vand.u32 %v355, 127
      %vm357 = vcmp.lt.s32.totalorder %v356, 17
      %v358 = vsel %vm357, %v348, %v352
      %v359 = vsel %vm357, %v350, %v354
      %v360 = vsel %vm357, %v352, %v348
      %v361 = vsel %vm357, %v354, %v350
      %v362 = vld [vmem:[%s5] sm:$0x3]
      %v364 = vlaneseq
      %v365 = vshrl.u32 %v364, 7
      %v366 = vsub.s32 0, %v365
      %v367 = vrot.slane %v362, %v366
      %v368 = vlaneseq
      %v369 = vshrl.u32 %v368, 7
      %v370 = vsub.s32 1, %v369
      %v371 = vrot.slane %v362, %v370
      %v374 = vmul.f32 %v360, %v367
      %v375 = vmul.f32 %v358, %v371
      %v376 = vmul.f32 %v361, %v367
      %v377 = vmul.f32 %v359, %v371
      %378 = vrot.lane.b32.xlu0 %v343, 16
      %v379 = vpop.permute.xlu0 %378
      %380 = vrot.lane.b32.xlu0 %v345, 16
      %v381 = vpop.permute.xlu0 %380
      %382 = vrot.lane.b32.xlu0 %v344, 16
      %v383 = vpop.permute.xlu0 %382
      %384 = vrot.lane.b32.xlu0 %v346, 16
      %v385 = vpop.permute.xlu0 %384
      %vm386 = vcmp.lt.s32.totalorder %v356, 16
      %v387 = vsel %vm386, %v379, %v383
      %v388 = vsel %vm386, %v381, %v385
      %v389 = vsel %vm386, %v383, %v379
      %v390 = vsel %vm386, %v385, %v381
      %s391 = scalar_lea.vmem %s5, 2
      %v392 = vld [vmem:[%s391] sm:$0x3]
      %v394 = vlaneseq
      %v395 = vshrl.u32 %v394, 7
      %v396 = vsub.s32 0, %v395
      %v397 = vrot.slane %v392, %v396
      %v398 = vlaneseq
      %v399 = vshrl.u32 %v398, 7
      %v400 = vsub.s32 1, %v399
      %v401 = vrot.slane %v392, %v400
      %v404 = vmul.f32 %v389, %v397
      %v405 = vmul.f32 %v387, %v401
      %v406 = vmul.f32 %v390, %v397
      %v407 = vmul.f32 %v388, %v401
      %408 = vrot.lane.b32.xlu0 %v343, 15
      %v409 = vpop.permute.xlu0 %408
      %410 = vrot.lane.b32.xlu0 %v345, 15
      %v411 = vpop.permute.xlu0 %410
      %412 = vrot.lane.b32.xlu0 %v344, 15
      %v413 = vpop.permute.xlu0 %412
      %414 = vrot.lane.b32.xlu0 %v346, 15
      %v415 = vpop.permute.xlu0 %414
      %vm416 = vcmp.lt.s32.totalorder %v356, 15
      %v417 = vsel %vm416, %v409, %v413
      %v418 = vsel %vm416, %v411, %v415
      %v419 = vsel %vm416, %v413, %v409
      %v420 = vsel %vm416, %v415, %v411
      %s421 = scalar_lea.vmem %s5, 4
      %v422 = vld [vmem:[%s421] sm:$0x3]
      %v424 = vlaneseq
      %v425 = vshrl.u32 %v424, 7
      %v426 = vsub.s32 0, %v425
      %v427 = vrot.slane %v422, %v426
      %v428 = vlaneseq
      %v429 = vshrl.u32 %v428, 7
      %v430 = vsub.s32 1, %v429
      %v431 = vrot.slane %v422, %v430
      %v434 = vmul.f32 %v419, %v427
      %v435 = vmul.f32 %v417, %v431
      %v436 = vmul.f32 %v420, %v427
      %v437 = vmul.f32 %v418, %v431
      %438 = vrot.lane.b32.xlu0 %v343, 1
      %v439 = vpop.permute.xlu0 %438
      %440 = vrot.lane.b32.xlu0 %v345, 1
      %v441 = vpop.permute.xlu0 %440
      %442 = vrot.lane.b32.xlu0 %v344, 1
      %v443 = vpop.permute.xlu0 %442
      %444 = vrot.lane.b32.xlu0 %v346, 1
      %v445 = vpop.permute.xlu0 %444
      %vm446 = vcmp.lt.s32.totalorder %v356, 1
      %v447 = vsel %vm446, %v439, %v443
      %v448 = vsel %vm446, %v441, %v445
      %v449 = vsel %vm446, %v443, %v439
      %v450 = vsel %vm446, %v445, %v441
      %s451 = scalar_lea.vmem %s5, 6
      %v452 = vld [vmem:[%s451] sm:$0x3]
      %v454 = vlaneseq
      %v455 = vshrl.u32 %v454, 7
      %v456 = vsub.s32 0, %v455
      %v457 = vrot.slane %v452, %v456
      %v458 = vlaneseq
      %v459 = vshrl.u32 %v458, 7
      %v460 = vsub.s32 1, %v459
      %v461 = vrot.slane %v452, %v460
      %v464 = vmul.f32 %v449, %v457
      %v465 = vmul.f32 %v447, %v461
      %v466 = vmul.f32 %v450, %v457
      %v467 = vmul.f32 %v448, %v461
      %s468 = scalar_lea.vmem %s5, 8
      %v469 = vld [vmem:[%s468] sm:$0x3]
      %v471 = vlaneseq
      %v472 = vshrl.u32 %v471, 7
      %v473 = vsub.s32 0, %v472
      %v474 = vrot.slane %v469, %v473
      %v475 = vlaneseq
      %v476 = vshrl.u32 %v475, 7
      %v477 = vsub.s32 1, %v476
      %v478 = vrot.slane %v469, %v477
      %v481 = vmul.f32 %v343, %v474
      %v482 = vmul.f32 %v344, %v478
      %v483 = vmul.f32 %v345, %v474
      %v484 = vmul.f32 %v346, %v478
      %485 = vrot.lane.b32.xlu0 %v343, 127
      %v486 = vpop.permute.xlu0 %485
      %487 = vrot.lane.b32.xlu0 %v345, 127
      %v488 = vpop.permute.xlu0 %487
      %489 = vrot.lane.b32.xlu0 %v344, 127
      %v490 = vpop.permute.xlu0 %489
      %491 = vrot.lane.b32.xlu0 %v346, 127
      %v492 = vpop.permute.xlu0 %491
      %vm493 = vcmp.lt.s32.totalorder %v356, 127
      %v494 = vsel %vm493, %v486, %v490
      %v495 = vsel %vm493, %v488, %v492
      %v496 = vsel %vm493, %v490, %v486
      %v497 = vsel %vm493, %v492, %v488
      %s498 = scalar_lea.vmem %s5, 10
      %v499 = vld [vmem:[%s498] sm:$0x3]
      %v501 = vlaneseq
      %v502 = vshrl.u32 %v501, 7
      %v503 = vsub.s32 0, %v502
      %v504 = vrot.slane %v499, %v503
      %v505 = vlaneseq
      %v506 = vshrl.u32 %v505, 7
      %v507 = vsub.s32 1, %v506
      %v508 = vrot.slane %v499, %v507
      %v511 = vmul.f32 %v494, %v504
      %v512 = vmul.f32 %v496, %v508
      %v513 = vmul.f32 %v495, %v504
      %v514 = vmul.f32 %v497, %v508
      %515 = vrot.lane.b32.xlu0 %v343, 113
      %v516 = vpop.permute.xlu0 %515
      %517 = vrot.lane.b32.xlu0 %v345, 113
      %v518 = vpop.permute.xlu0 %517
      %519 = vrot.lane.b32.xlu0 %v344, 113
      %v520 = vpop.permute.xlu0 %519
      %521 = vrot.lane.b32.xlu0 %v346, 113
      %v522 = vpop.permute.xlu0 %521
      %vm523 = vcmp.lt.s32.totalorder %v356, 113
      %v524 = vsel %vm523, %v516, %v520
      %v525 = vsel %vm523, %v518, %v522
      %v526 = vsel %vm523, %v520, %v516
      %v527 = vsel %vm523, %v522, %v518
      %s528 = scalar_lea.vmem %s5, 12
      %v529 = vld [vmem:[%s528] sm:$0x3]
      %v531 = vlaneseq
      %v532 = vshrl.u32 %v531, 7
      %v533 = vsub.s32 0, %v532
      %v534 = vrot.slane %v529, %v533
      %v535 = vlaneseq
      %v536 = vshrl.u32 %v535, 7
      %v537 = vsub.s32 1, %v536
      %v538 = vrot.slane %v529, %v537
      %v541 = vmul.f32 %v524, %v534
      %v542 = vmul.f32 %v526, %v538
      %v543 = vmul.f32 %v525, %v534
      %v544 = vmul.f32 %v527, %v538
      %545 = vrot.lane.b32.xlu0 %v343, 112
      %v546 = vpop.permute.xlu0 %545
      %547 = vrot.lane.b32.xlu0 %v345, 112
      %v548 = vpop.permute.xlu0 %547
      %549 = vrot.lane.b32.xlu0 %v344, 112
      %v550 = vpop.permute.xlu0 %549
      %551 = vrot.lane.b32.xlu0 %v346, 112
      %v552 = vpop.permute.xlu0 %551
      %vm553 = vcmp.lt.s32.totalorder %v356, 112
      %v554 = vsel %vm553, %v546, %v550
      %v555 = vsel %vm553, %v548, %v552
      %v556 = vsel %vm553, %v550, %v546
      %v557 = vsel %vm553, %v552, %v548
      %s558 = scalar_lea.vmem %s5, 14
      %v559 = vld [vmem:[%s558] sm:$0x3]
      %v561 = vlaneseq
      %v562 = vshrl.u32 %v561, 7
      %v563 = vsub.s32 0, %v562
      %v564 = vrot.slane %v559, %v563
      %v565 = vlaneseq
      %v566 = vshrl.u32 %v565, 7
      %v567 = vsub.s32 1, %v566
      %v568 = vrot.slane %v559, %v567
      %v571 = vmul.f32 %v554, %v564
      %v572 = vmul.f32 %v556, %v568
      %v573 = vmul.f32 %v555, %v564
      %v574 = vmul.f32 %v557, %v568
      %575 = vrot.lane.b32.xlu0 %v343, 111
      %v576 = vpop.permute.xlu0 %575
      %577 = vrot.lane.b32.xlu0 %v345, 111
      %v578 = vpop.permute.xlu0 %577
      %579 = vrot.lane.b32.xlu0 %v344, 111
      %v580 = vpop.permute.xlu0 %579
      %581 = vrot.lane.b32.xlu0 %v346, 111
      %v582 = vpop.permute.xlu0 %581
      %vm583 = vcmp.lt.s32.totalorder %v356, 111
      %v584 = vsel %vm583, %v576, %v580
      %v585 = vsel %vm583, %v578, %v582
      %v586 = vsel %vm583, %v580, %v576
      %v587 = vsel %vm583, %v582, %v578
      %s588 = scalar_lea.vmem %s5, 16
      %v589 = vld [vmem:[%s588] sm:$0x3]
      %v591 = vlaneseq
      %v592 = vshrl.u32 %v591, 7
      %v593 = vsub.s32 0, %v592
      %v594 = vrot.slane %v589, %v593
      %v595 = vlaneseq
      %v596 = vshrl.u32 %v595, 7
      %v597 = vsub.s32 1, %v596
      %v598 = vrot.slane %v589, %v597
      %v601 = vmul.f32 %v584, %v594
      %v602 = vmul.f32 %v586, %v598
      %v603 = vmul.f32 %v585, %v594
      %v604 = vmul.f32 %v587, %v598
      %v605 = vpack.c.bf16 %v376, %v374
      %v606 = vpack.c.bf16 %v377, %v375
      %v607 = vpack.c.bf16 %v406, %v404
      %v608 = vpack.c.bf16 %v407, %v405
      %v609 = vpack.c.bf16 %v436, %v434
      %v610 = vpack.c.bf16 %v437, %v435
      %v611 = vpack.c.bf16 %v466, %v464
      %v612 = vpack.c.bf16 %v467, %v465
      %v613 = vpack.c.bf16 %v483, %v481
      %v614 = vpack.c.bf16 %v484, %v482
      %v615 = vpack.c.bf16 %v513, %v511
      %v616 = vpack.c.bf16 %v514, %v512
      %v617 = vpack.c.bf16 %v543, %v541
      %v618 = vpack.c.bf16 %v544, %v542
      %v619 = vpack.c.bf16 %v573, %v571
      %v620 = vpack.c.bf16 %v574, %v572
      %v621 = vpack.c.bf16 %v603, %v601
      %v622 = vpack.c.bf16 %v604, %v602
      %v623 = vld [vmem:[%s3] sm:$0xff]
      %v624 = vld [vmem:[%s4] sm:$0xff]
      %626 = vset.pattern.permute.xlu0 0
      %627 = vperm.xlu0 %626, %v624
      %v628 = vpop.permute.xlu0 %627
      %v631 = vunpack.c.l.b16 %v623
      %v632 = vunpack.c.h.b16 %v623
      %v633 = vpack.c.b16 %v631, %v631
      %v634 = vpack.c.b16 %v632, %v632
      %vm636 = vcmask 130048
      %v638 = vsel %vm636, %v634, 0
      %640 = vmatprep.subr.bf16.mxu0 %v620
      %641 = vmatpush1.bf16.msra.mxu0 %v619
      %642 = vmatprep.subr.bf16.mxu0 %v618
      %643 = vmatpush1.bf16.msra.mxu0 %v617
      %644 = vmatprep.subr.bf16.mxu0 %v616
      %645 = vmatpush1.bf16.msra.mxu0 %v615
      %646 = vmatprep.subr.bf16.mxu0 %v614
      %647 = vmatpush1.bf16.msra.mxu0 %v613
      %648 = vmatprep.subr.bf16.mxu0 %v612
      %649 = vmatpush1.bf16.msra.mxu0 %v611
      %650 = vmatprep.subr.bf16.mxu0 %v610
      %651 = vmatpush1.bf16.msra.mxu0 %v609
      %652 = vmatprep.subr.bf16.mxu0 %v608
      %653 = vmatpush1.bf16.msra.mxu0 %v607
      %654 = vmatprep.subr.bf16.mxu0 %v606
      %655 = vmatpush1.bf16.msra.mxu0 %v605
      %656 = vmatprep.subr.bf16.mxu0 0
      %657 = vmatpush2.bf16.msra.mxu0 0
      %658 = vmatprep.subr.bf16.mxu0 0
      %659 = vmatpush2.bf16.msra.mxu0 0
      %660 = vmatprep.subr.bf16.mxu0 0
      %661 = vmatpush2.bf16.msra.mxu0 0
      %662 = vmatprep.subr.bf16.mxu0 0
      %663 = vmatpush2.bf16.msra.mxu0 0
      %664 = vmatprep.subr.bf16.mxu0 0
      %665 = vmatpush2.bf16.msra.mxu0 0
      %666 = vmatprep.subr.bf16.mxu0 0
      %667 = vmatpush2.bf16.msra.mxu0 0
      %668 = vmatprep.subr.bf16.mxu0 0
      %669 = vmatpush2.bf16.msra.mxu0 0
      %670 = vmatprep.subr.bf16.mxu0 %v622
      %671 = vmatpush2.bf16.msra.mxu0 %v621
      %672 = vmatprep.mubr.bf16.mxu0 %v638
      %673 = vmatmul.mubr.bf16.gmra.mxu0 %v633
      %v674 = vpop.f32.mrf.mxu0
      %v675 = vadd.f32 %v628, %v674
      %v676 = vpop.f32.mrf.mxu0
      %v677 = vadd.f32 %v628, %v676
      %v678 = vpop.f32.mrf.mxu0
      %v679 = vpop.f32.mrf.mxu0
      %680 = vdwg.mxu0
      %v681 = vld [vmem:[%s6] sm:$0xff]
      %v682 = vld [vmem:[%s6 + $0x8] sm:$0xff]
      %v683 = vadd.f32 %v675, %v681
      %v684 = vadd.f32 %v677, %v682
      %v685 = vmul.f32 %v683, %v683
      %v686 = vmul.f32 %v684, %v684
      %v687 = vrot.slane %v685, 4
      %v688 = vadd.f32 %v685, %v687
      %v689 = vrot.slane %v688, 2
      %v690 = vadd.f32 %v688, %v689
      %v691 = vrot.slane %v690, 1
      %v692 = vadd.f32 %v690, %v691
      %v693 = vrot.slane %v686, 4
      %v694 = vadd.f32 %v686, %v693
      %v695 = vrot.slane %v694, 2
      %v696 = vadd.f32 %v694, %v695
      %v697 = vrot.slane %v696, 1
      %v698 = vadd.f32 %v696, %v697
      %v699 = vrcp.pop 8.0
      %v700 = vmul.f32 %v692, %v699
      %v701 = vmul.f32 %v698, %v699
      %v702 = vadd.f32 %v700, 1e-05
      %v703 = vadd.f32 %v701, 1e-05
      %v704 = vrsqrt.pop %v702
      %v705 = vrsqrt.pop %v703
      %v706 = vmul.f32 %v683, %v704
      %v707 = vmul.f32 %v684, %v705
      %v708 = vld [vmem:[%s7] sm:$0xff]
      %710 = vset.pattern.permute.xlu0 0
      %711 = vperm.xlu0 %710, %v708
      %v712 = vpop.permute.xlu0 %711
      %v714 = vmul.f32 %v706, %v712
      %v715 = vmul.f32 %v707, %v712
      %v716 = vadd.f32 %v714, %v681
      %v717 = vadd.f32 %v715, %v682
      %v718 = vadd.f32 %v716, %v675
      %v719 = vadd.f32 %v717, %v677
      %720 = vst [vmem:[%s305] sm:$0xff] %v718
      %721 = vst [vmem:[%s305 + $0x8] sm:$0xff] %v719
      %p722 = scmp.lt.s32.totalorder %s19, 1
      %s723 = scalar_select %p722, %s19, 1
      %s724 = smul.addr %s723, 2
      %s725 = smul.addr %s724, 8
      %s726 = scalar_lea.vmem %s8, %s725
      // Predicated region
      $region53: #{_lambda_.3} parent=51 // pred_check
        %p727 = pneg %p210
      $region54: #{_lambda_.3} parent=51 // pred_check_branch
        %729 = sbr.rel (%p727) target = $region56
      $region55: #{_lambda_.3} parent=51 // pred_region
        _
      $region56: #{_lambda_.3} parent=51 // pred_fallthru
        _
    $region52: #{_lambda_.3} parent=5 // pred_fallthru
      _
    %p730 = scmp.le.s32.totalorder 2, %s14
    // Predicated region
    $region57: #{_lambda_.3} parent=5 // pred_check
      %p731 = pneg %p730
    $region58: #{_lambda_.3} parent=5 // pred_check_branch
      %733 = sbr.rel (%p731) target = $region60
    $region59: #{_lambda_.3} parent=5 // pred_region
      %s734 = ssub.s32 %s14, 2
      // Predicated region
      $region61: #{_lambda_.3} parent=59 // pred_check
        %p735 = pneg %p216
      $region62: #{_lambda_.3} parent=59 // pred_check_branch
        %737 = sbr.rel (%p735) target = $region64
      $region63: #{_lambda_.3} parent=59 // pred_region
        %p738 = scmp.lt.s32.totalorder %s20, 1
        %s739 = scalar_select %p738, %s20, 1
        %s740 = smul.addr %s739, 2
        %s741 = smul.addr %s740, 8
        %s742 = scalar_lea.vmem %s8, %s741
      $region64: #{_lambda_.3} parent=59 // pred_fallthru
        _
    $region60: #{_lambda_.3} parent=5 // pred_fallthru
      _
  $region6: #{_lambda_.3} parent=0 // loop_footer
    %s18 = sadd.s32 1, %s14
  $region7: #{_lambda_.3} parent=0 // loop_footer_branch
    %13 = sbr.rel target = $region3
  $region8: #{_lambda_.3} parent=0 // loop_exit
    _

// kernel: _lambda_.2
$region0: #{_lambda_.2}
  #allocation0 [shape = 'u32[]', space=smem, size = 0x4, offset = 0x4, fixed_abs, tag = 'smem constant byte address 0x4 - core index']
  #allocation1 [shape = 'u32[144,128]{1,0:T(1,128)}', space=vmem, size = 0x12000, scoped, tag = 'internal scratch']
  %s0 = inlined_call_operand.vmem [shape: f32[2,8,256], index: 0, kind: input, shape index: {}]
  %s1 = inlined_call_operand.vmem [shape: f32[8,1], index: 1, kind: input, shape index: {}]
  %s2 = inlined_call_operand.vmem [shape: f32[8,1], index: 2, kind: input, shape index: {}]
  %s3 = inlined_call_operand.vmem [shape: bf16[8,72], index: 3, kind: input, shape index: {}]
  %s4 = inlined_call_operand.vmem [shape: f32[8,1], index: 4, kind: input, shape index: {}]
  %s5 = inlined_call_operand.vmem [shape: f32[9,1,256], index: 5, kind: input, shape index: {}]
  %s6 = inlined_call_operand.vmem [shape: f32[8,256], index: 6, kind: input, shape index: {}]
  %s7 = inlined_call_operand.vmem [shape: f32[8,1], index: 7, kind: input, shape index: {}]
  %s8 = inlined_call_operand.vmem [shape: f32[2,8,256], index: 8, kind: output, shape index: {}]
  %s9 = sld [smem:[#allocation0]]
  $region65: #{_lambda_.2} parent=0
    _
  %s11 = ssub.s32 1, %s9
  %s12 = scalar_select 0, %s11, %s9
  loop: start=0, step=1, limit=4
  $region2: #{_lambda_.2} parent=0 // loop_pre_header
    _
  $region3: #{_lambda_.2} parent=0 // loop_header
    %s14 = sphi 0, %s18
    %p15 = scmp.ge.s32.totalorder %s14, 4
    %s24 = sphi 0, %s26
    %s27 = sphi 0, %s24
    %s28 = sphi 0, %s27
    %s44 = sphi 0, %s28
    %s48 = sphi 0, %s48
    %s50 = sphi 0, %s48
    %s51 = sphi 0, %s50
    %s65 = sphi 0, %s51
    %s69 = sphi 0, %s69
    %s71 = sphi 0, %s69
    %s72 = sphi 0, %s71
    %s86 = sphi 0, %s72
    %s90 = sphi 0, %s90
    %s92 = sphi 0, %s90
    %s93 = sphi 0, %s92
    %s107 = sphi 0, %s93
    %s111 = sphi 0, %s111
    %s113 = sphi 0, %s111
    %s114 = sphi 0, %s113
    %s128 = sphi 0, %s114
    %s132 = sphi 0, %s132
    %s134 = sphi 0, %s132
    %s135 = sphi 0, %s134
    %s149 = sphi 0, %s135
    %s153 = sphi 0, %s153
    %s155 = sphi 0, %s153
    %s156 = sphi 0, %s155
    %s170 = sphi 0, %s156
    %s174 = sphi 0, %s174
    %s176 = sphi 0, %s174
    %s177 = sphi 0, %s176
    %s191 = sphi 0, %s177
    %s197 = sphi 0, %s199
    %s200 = sphi 0, %s197
    %s201 = sphi 0, %s200
    %s217 = sphi 0, %s201
  $region4: #{_lambda_.2} parent=0 // loop_header_branch
    %17 = sbr.rel (%p15) target = $region8
  $region5: #{_lambda_.2} parent=0 // loop_body
    %s19 = ssub.s32 %s14, 1
    %s20 = ssub.s32 %s14, 2
    %s21 = sadd.s32 %s14, 1
    %s22 = ssub.s32 %s14, %s21
    %p23 = scmp.eq.s32.totalorder %s22, 0
    %s25 = sadd.s32 %s24, 1
    %s26 = scalar_select %p23, %s24, %s25
    %p29 = pneg %p23
    %p30 = scmp.eq.s32.totalorder %s14, 1
    %p31 = por %p29, %p30
    %p32 = scmp.ne.s32.totalorder %s24, %s27
    %p33 = scmp.eq.s32.totalorder %s14, 0
    %p34 = por %p32, %p33
    %p35 = scmp.ne.s32.totalorder %s24, %s27
    %p36 = scmp.eq.s32.totalorder %s19, 1
    %p37 = por %p35, %p36
    %p38 = scmp.ne.s32.totalorder %s27, %s28
    %p39 = scmp.eq.s32.totalorder %s19, 0
    %p40 = por %p38, %p39
    %p41 = scmp.ne.s32.totalorder %s27, %s28
    %p42 = scmp.eq.s32.totalorder %s20, 1
    %p43 = por %p41, %p42
    %p45 = scmp.ne.s32.totalorder %s28, %s44
    %p46 = scmp.eq.s32.totalorder %s20, 0
    %p47 = por %p45, %p46
    %s49 = sadd.s32 %s48, 1
    %p52 = scmp.eq.s32.totalorder %s14, 1
    %p53 = scmp.ne.s32.totalorder %s48, %s50
    %p54 = scmp.eq.s32.totalorder %s14, 0
    %p55 = por %p53, %p54
    %p56 = scmp.ne.s32.totalorder %s48, %s50
    %p57 = scmp.eq.s32.totalorder %s19, 1
    %p58 = por %p56, %p57
    %p59 = scmp.ne.s32.totalorder %s50, %s51
    %p60 = scmp.eq.s32.totalorder %s19, 0
    %p61 = por %p59, %p60
    %p62 = scmp.ne.s32.totalorder %s50, %s51
    %p63 = scmp.eq.s32.totalorder %s20, 1
    %p64 = por %p62, %p63
    %p66 = scmp.ne.s32.totalorder %s51, %s65
    %p67 = scmp.eq.s32.totalorder %s20, 0
    %p68 = por %p66, %p67
    %s70 = sadd.s32 %s69, 1
    %p73 = scmp.eq.s32.totalorder %s14, 1
    %p74 = scmp.ne.s32.totalorder %s69, %s71
    %p75 = scmp.eq.s32.totalorder %s14, 0
    %p76 = por %p74, %p75
    %p77 = scmp.ne.s32.totalorder %s69, %s71
    %p78 = scmp.eq.s32.totalorder %s19, 1
    %p79 = por %p77, %p78
    %p80 = scmp.ne.s32.totalorder %s71, %s72
    %p81 = scmp.eq.s32.totalorder %s19, 0
    %p82 = por %p80, %p81
    %p83 = scmp.ne.s32.totalorder %s71, %s72
    %p84 = scmp.eq.s32.totalorder %s20, 1
    %p85 = por %p83, %p84
    %p87 = scmp.ne.s32.totalorder %s72, %s86
    %p88 = scmp.eq.s32.totalorder %s20, 0
    %p89 = por %p87, %p88
    %s91 = sadd.s32 %s90, 1
    %p94 = scmp.eq.s32.totalorder %s14, 1
    %p95 = scmp.ne.s32.totalorder %s90, %s92
    %p96 = scmp.eq.s32.totalorder %s14, 0
    %p97 = por %p95, %p96
    %p98 = scmp.ne.s32.totalorder %s90, %s92
    %p99 = scmp.eq.s32.totalorder %s19, 1
    %p100 = por %p98, %p99
    %p101 = scmp.ne.s32.totalorder %s92, %s93
    %p102 = scmp.eq.s32.totalorder %s19, 0
    %p103 = por %p101, %p102
    %p104 = scmp.ne.s32.totalorder %s92, %s93
    %p105 = scmp.eq.s32.totalorder %s20, 1
    %p106 = por %p104, %p105
    %p108 = scmp.ne.s32.totalorder %s93, %s107
    %p109 = scmp.eq.s32.totalorder %s20, 0
    %p110 = por %p108, %p109
    %s112 = sadd.s32 %s111, 1
    %p115 = scmp.eq.s32.totalorder %s14, 1
    %p116 = scmp.ne.s32.totalorder %s111, %s113
    %p117 = scmp.eq.s32.totalorder %s14, 0
    %p118 = por %p116, %p117
    %p119 = scmp.ne.s32.totalorder %s111, %s113
    %p120 = scmp.eq.s32.totalorder %s19, 1
    %p121 = por %p119, %p120
    %p122 = scmp.ne.s32.totalorder %s113, %s114
    %p123 = scmp.eq.s32.totalorder %s19, 0
    %p124 = por %p122, %p123
    %p125 = scmp.ne.s32.totalorder %s113, %s114
    %p126 = scmp.eq.s32.totalorder %s20, 1
    %p127 = por %p125, %p126
    %p129 = scmp.ne.s32.totalorder %s114, %s128
    %p130 = scmp.eq.s32.totalorder %s20, 0
    %p131 = por %p129, %p130
    %s133 = sadd.s32 %s132, 1
    %p136 = scmp.eq.s32.totalorder %s14, 1
    %p137 = scmp.ne.s32.totalorder %s132, %s134
    %p138 = scmp.eq.s32.totalorder %s14, 0
    %p139 = por %p137, %p138
    %p140 = scmp.ne.s32.totalorder %s132, %s134
    %p141 = scmp.eq.s32.totalorder %s19, 1
    %p142 = por %p140, %p141
    %p143 = scmp.ne.s32.totalorder %s134, %s135
    %p144 = scmp.eq.s32.totalorder %s19, 0
    %p145 = por %p143, %p144
    %p146 = scmp.ne.s32.totalorder %s134, %s135
    %p147 = scmp.eq.s32.totalorder %s20, 1
    %p148 = por %p146, %p147
    %p150 = scmp.ne.s32.totalorder %s135, %s149
    %p151 = scmp.eq.s32.totalorder %s20, 0
    %p152 = por %p150, %p151
    %s154 = sadd.s32 %s153, 1
    %p157 = scmp.eq.s32.totalorder %s14, 1
    %p158 = scmp.ne.s32.totalorder %s153, %s155
    %p159 = scmp.eq.s32.totalorder %s14, 0
    %p160 = por %p158, %p159
    %p161 = scmp.ne.s32.totalorder %s153, %s155
    %p162 = scmp.eq.s32.totalorder %s19, 1
    %p163 = por %p161, %p162
    %p164 = scmp.ne.s32.totalorder %s155, %s156
    %p165 = scmp.eq.s32.totalorder %s19, 0
    %p166 = por %p164, %p165
    %p167 = scmp.ne.s32.totalorder %s155, %s156
    %p168 = scmp.eq.s32.totalorder %s20, 1
    %p169 = por %p167, %p168
    %p171 = scmp.ne.s32.totalorder %s156, %s170
    %p172 = scmp.eq.s32.totalorder %s20, 0
    %p173 = por %p171, %p172
    %s175 = sadd.s32 %s174, 1
    %p178 = scmp.eq.s32.totalorder %s14, 1
    %p179 = scmp.ne.s32.totalorder %s174, %s176
    %p180 = scmp.eq.s32.totalorder %s14, 0
    %p181 = por %p179, %p180
    %p182 = scmp.ne.s32.totalorder %s174, %s176
    %p183 = scmp.eq.s32.totalorder %s19, 1
    %p184 = por %p182, %p183
    %p185 = scmp.ne.s32.totalorder %s176, %s177
    %p186 = scmp.eq.s32.totalorder %s19, 0
    %p187 = por %p185, %p186
    %p188 = scmp.ne.s32.totalorder %s176, %s177
    %p189 = scmp.eq.s32.totalorder %s20, 1
    %p190 = por %p188, %p189
    %p192 = scmp.ne.s32.totalorder %s177, %s191
    %p193 = scmp.eq.s32.totalorder %s20, 0
    %p194 = por %p192, %p193
    %s195 = ssub.s32 %s14, %s21
    %p196 = scmp.eq.s32.totalorder %s195, 0
    %s198 = sadd.s32 %s197, 1
    %s199 = scalar_select %p196, %s197, %s198
    %p202 = pneg %p196
    %p203 = scmp.eq.s32.totalorder %s14, 1
    %p204 = por %p202, %p203
    %p205 = scmp.ne.s32.totalorder %s197, %s200
    %p206 = scmp.eq.s32.totalorder %s14, 0
    %p207 = por %p205, %p206
    %p208 = scmp.ne.s32.totalorder %s197, %s200
    %p209 = scmp.eq.s32.totalorder %s19, 1
    %p210 = por %p208, %p209
    %p211 = scmp.ne.s32.totalorder %s200, %s201
    %p212 = scmp.eq.s32.totalorder %s19, 0
    %p213 = por %p211, %p212
    %p214 = scmp.ne.s32.totalorder %s200, %s201
    %p215 = scmp.eq.s32.totalorder %s20, 1
    %p216 = por %p214, %p215
    %p218 = scmp.ne.s32.totalorder %s201, %s217
    %p219 = scmp.eq.s32.totalorder %s20, 0
    %p220 = por %p218, %p219
    %p221 = scmp.le.s32.totalorder 1, %s14
    %p222 = scmp.lt.s32.totalorder %s14, 3
    %p223 = pnand %p221, %p222
    %p224 = pneg %p223
    // Predicated region
    $region9: #{_lambda_.2} parent=5 // pred_check
      _
    $region10: #{_lambda_.2} parent=5 // pred_check_branch
      %226 = sbr.rel (%p223) target = $region12
    $region11: #{_lambda_.2} parent=5 // pred_region
      %s227 = ssub.s32 %s14, 1
      // Predicated region
      $region13: #{_lambda_.2} parent=11 // pred_check
        %p228 = pneg %p61
      $region14: #{_lambda_.2} parent=11 // pred_check_branch
        %230 = sbr.rel (%p228) target = $region16
      $region15: #{_lambda_.2} parent=11 // pred_region
        _
      $region16: #{_lambda_.2} parent=11 // pred_fallthru
        _
      // Predicated region
      $region17: #{_lambda_.2} parent=11 // pred_check
        %p231 = pneg %p82
      $region18: #{_lambda_.2} parent=11 // pred_check_branch
        %233 = sbr.rel (%p231) target = $region20
      $region19: #{_lambda_.2} parent=11 // pred_region
        _
      $region20: #{_lambda_.2} parent=11 // pred_fallthru
        _
      // Predicated region
      $region21: #{_lambda_.2} parent=11 // pred_check
        %p234 = pneg %p103
      $region22: #{_lambda_.2} parent=11 // pred_check_branch
        %236 = sbr.rel (%p234) target = $region24
      $region23: #{_lambda_.2} parent=11 // pred_region
        _
      $region24: #{_lambda_.2} parent=11 // pred_fallthru
        _
      // Predicated region
      $region25: #{_lambda_.2} parent=11 // pred_check
        %p237 = pneg %p124
      $region26: #{_lambda_.2} parent=11 // pred_check_branch
        %239 = sbr.rel (%p237) target = $region28
      $region27: #{_lambda_.2} parent=11 // pred_region
        _
      $region28: #{_lambda_.2} parent=11 // pred_fallthru
        _
      // Predicated region
      $region29: #{_lambda_.2} parent=11 // pred_check
        %p240 = pneg %p145
      $region30: #{_lambda_.2} parent=11 // pred_check_branch
        %242 = sbr.rel (%p240) target = $region32
      $region31: #{_lambda_.2} parent=11 // pred_region
        _
      $region32: #{_lambda_.2} parent=11 // pred_fallthru
        _
      // Predicated region
      $region33: #{_lambda_.2} parent=11 // pred_check
        %p243 = pneg %p166
      $region34: #{_lambda_.2} parent=11 // pred_check_branch
        %245 = sbr.rel (%p243) target = $region36
      $region35: #{_lambda_.2} parent=11 // pred_region
        _
      $region36: #{_lambda_.2} parent=11 // pred_fallthru
        _
      // Predicated region
      $region37: #{_lambda_.2} parent=11 // pred_check
        %p246 = pneg %p187
      $region38: #{_lambda_.2} parent=11 // pred_check_branch
        %248 = sbr.rel (%p246) target = $region40
      $region39: #{_lambda_.2} parent=11 // pred_region
        _
      $region40: #{_lambda_.2} parent=11 // pred_fallthru
        _
    $region12: #{_lambda_.2} parent=5 // pred_fallthru
      _
    %p249 = scmp.lt.s32.totalorder %s14, 2
    // Predicated region
    $region41: #{_lambda_.2} parent=5 // pred_check
      %p250 = pneg %p249
    $region42: #{_lambda_.2} parent=5 // pred_check_branch
      %252 = sbr.rel (%p250) target = $region44
    $region43: #{_lambda_.2} parent=5 // pred_region
      // Predicated region
      $region45: #{_lambda_.2} parent=43 // pred_check
        %p253 = pneg %p34
      $region46: #{_lambda_.2} parent=43 // pred_check_branch
        %255 = sbr.rel (%p253) target = $region48
      $region47: #{_lambda_.2} parent=43 // pred_region
        %p256 = scmp.lt.s32.totalorder %s14, 1
        %s257 = scalar_select %p256, %s14, 1
        %s258 = smul.addr %s257, 2
        %s259 = smul.addr %s258, 8
        %s260 = scalar_lea.vmem %s0, %s259
      $region48: #{_lambda_.2} parent=43 // pred_fallthru
        _
    $region44: #{_lambda_.2} parent=5 // pred_fallthru
      _
    %p261 = scmp.le.s32.totalorder 1, %s14
    %p262 = scmp.lt.s32.totalorder %s14, 3
    %p263 = pnand %p261, %p262
    %p264 = pneg %p263
    // Predicated region
    $region49: #{_lambda_.2} parent=5 // pred_check
      _
    $region50: #{_lambda_.2} parent=5 // pred_check_branch
      %266 = sbr.rel (%p263) target = $region52
    $region51: #{_lambda_.2} parent=5 // pred_region
      %s267 = ssub.s32 %s14, 1
      %p268 = scmp.lt.s32.totalorder %s19, 1
      %s269 = scalar_select %p268, %s19, 1
      %s270 = smul.addr %s269, 2
      %s271 = smul.addr %s270, 8
      %s272 = scalar_lea.vmem %s0, %s271
      %p273 = pneg %p40
      %p274 = pneg %p37
      %p275 = pneg %p61
      %p276 = pneg %p58
      %p277 = pneg %p82
      %p278 = pneg %p79
      %p279 = pneg %p103
      %p280 = pneg %p100
      %p281 = pneg %p124
      %p282 = pneg %p121
      %p283 = pneg %p145
      %p284 = pneg %p142
      %p285 = pneg %p166
      %p286 = pneg %p163
      %p287 = pneg %p187
      %p288 = pneg %p184
      %p289 = pneg %p213
      %p290 = pneg %p210
      %p291 = scmp.lt.s32.totalorder %s19, 1
      %s292 = scalar_select %p291, %s19, 1
      %s293 = smul.addr %s292, 2
      %s294 = smul.addr %s293, 8
      %s295 = scalar_lea.vmem %s8, %s294
      %p296 = scmp.lt.s32.totalorder %s19, 1
      %s297 = scalar_select %p296, %s19, 1
      %s298 = smul.addr %s297, 2
      %s299 = smul.addr %s298, 8
      %s300 = scalar_lea.vmem %s0, %s299
      %p301 = scmp.lt.s32.totalorder %s19, 1
      %s302 = scalar_select %p301, %s19, 1
      %s303 = smul.addr %s302, 2
      %s304 = smul.addr %s303, 8
      %s305 = scalar_lea.vmem %s8, %s304
      %v307 = vld [vmem:[%s300] sm:$0xff]
      %v308 = vld [vmem:[%s300 + $0x8] sm:$0xff]
      %v309 = vld [vmem:[%s1] sm:$0xff]
      %311 = vset.pattern.permute.xlu0 0
      %312 = vperm.xlu0 %311, %v309
      %v313 = vpop.permute.xlu0 %312
      %v315 = vmul.f32 %v307, %v313
      %v316 = vmul.f32 %v308, %v313
      %v317 = vld [vmem:[%s2] sm:$0xff]
      %319 = vset.pattern.permute.xlu0 0
      %320 = vperm.xlu0 %319, %v317
      %v321 = vpop.permute.xlu0 %320
      %v323 = vadd.f32 %v315, %v321
      %v324 = vadd.f32 %v316, %v321
      %v325 = vmax.f32 %v323, 0.0
      %v326 = vmax.f32 %v324, 0.0
      %327 = vrot.lane.b32.xlu0 %v325, 17
      %v328 = vpop.permute.xlu0 %327
      %329 = vrot.lane.b32.xlu0 %v326, 17
      %v330 = vpop.permute.xlu0 %329
      %v331 = vlaneseq
      %v332 = vand.u32 %v331, 127
      %vm333 = vcmp.lt.s32.totalorder %v332, 17
      %v334 = vsel %vm333, %v328, %v330
      %v335 = vsel %vm333, %v330, %v328
      %v336 = vld [vmem:[%s5] sm:$0x3]
      %v338 = vlaneseq
      %v339 = vshrl.u32 %v338, 7
      %v340 = vsub.s32 0, %v339
      %v341 = vrot.slane %v336, %v340
      %v342 = vlaneseq
      %v343 = vshrl.u32 %v342, 7
      %v344 = vsub.s32 1, %v343
      %v345 = vrot.slane %v336, %v344
      %v348 = vmul.f32 %v335, %v341
      %v349 = vmul.f32 %v334, %v345
      %350 = vrot.lane.b32.xlu0 %v325, 16
      %v351 = vpop.permute.xlu0 %350
      %352 = vrot.lane.b32.xlu0 %v326, 16
      %v353 = vpop.permute.xlu0 %352
      %vm354 = vcmp.lt.s32.totalorder %v332, 16
      %v355 = vsel %vm354, %v351, %v353
      %v356 = vsel %vm354, %v353, %v351
      %s357 = scalar_lea.vmem %s5, 2
      %v358 = vld [vmem:[%s357] sm:$0x3]
      %v360 = vlaneseq
      %v361 = vshrl.u32 %v360, 7
      %v362 = vsub.s32 0, %v361
      %v363 = vrot.slane %v358, %v362
      %v364 = vlaneseq
      %v365 = vshrl.u32 %v364, 7
      %v366 = vsub.s32 1, %v365
      %v367 = vrot.slane %v358, %v366
      %v370 = vmul.f32 %v356, %v363
      %v371 = vmul.f32 %v355, %v367
      %372 = vrot.lane.b32.xlu0 %v325, 15
      %v373 = vpop.permute.xlu0 %372
      %374 = vrot.lane.b32.xlu0 %v326, 15
      %v375 = vpop.permute.xlu0 %374
      %vm376 = vcmp.lt.s32.totalorder %v332, 15
      %v377 = vsel %vm376, %v373, %v375
      %v378 = vsel %vm376, %v375, %v373
      %s379 = scalar_lea.vmem %s5, 4
      %v380 = vld [vmem:[%s379] sm:$0x3]
      %v382 = vlaneseq
      %v383 = vshrl.u32 %v382, 7
      %v384 = vsub.s32 0, %v383
      %v385 = vrot.slane %v380, %v384
      %v386 = vlaneseq
      %v387 = vshrl.u32 %v386, 7
      %v388 = vsub.s32 1, %v387
      %v389 = vrot.slane %v380, %v388
      %v392 = vmul.f32 %v378, %v385
      %v393 = vmul.f32 %v377, %v389
      %394 = vrot.lane.b32.xlu0 %v325, 1
      %v395 = vpop.permute.xlu0 %394
      %396 = vrot.lane.b32.xlu0 %v326, 1
      %v397 = vpop.permute.xlu0 %396
      %vm398 = vcmp.lt.s32.totalorder %v332, 1
      %v399 = vsel %vm398, %v395, %v397
      %v400 = vsel %vm398, %v397, %v395
      %s401 = scalar_lea.vmem %s5, 6
      %v402 = vld [vmem:[%s401] sm:$0x3]
      %v404 = vlaneseq
      %v405 = vshrl.u32 %v404, 7
      %v406 = vsub.s32 0, %v405
      %v407 = vrot.slane %v402, %v406
      %v408 = vlaneseq
      %v409 = vshrl.u32 %v408, 7
      %v410 = vsub.s32 1, %v409
      %v411 = vrot.slane %v402, %v410
      %v414 = vmul.f32 %v400, %v407
      %v415 = vmul.f32 %v399, %v411
      %s416 = scalar_lea.vmem %s5, 8
      %v417 = vld [vmem:[%s416] sm:$0x3]
      %v419 = vlaneseq
      %v420 = vshrl.u32 %v419, 7
      %v421 = vsub.s32 0, %v420
      %v422 = vrot.slane %v417, %v421
      %v423 = vlaneseq
      %v424 = vshrl.u32 %v423, 7
      %v425 = vsub.s32 1, %v424
      %v426 = vrot.slane %v417, %v425
      %v429 = vmul.f32 %v325, %v422
      %v430 = vmul.f32 %v326, %v426
      %431 = vrot.lane.b32.xlu0 %v325, 127
      %v432 = vpop.permute.xlu0 %431
      %433 = vrot.lane.b32.xlu0 %v326, 127
      %v434 = vpop.permute.xlu0 %433
      %vm435 = vcmp.lt.s32.totalorder %v332, 127
      %v436 = vsel %vm435, %v432, %v434
      %v437 = vsel %vm435, %v434, %v432
      %s438 = scalar_lea.vmem %s5, 10
      %v439 = vld [vmem:[%s438] sm:$0x3]
      %v441 = vlaneseq
      %v442 = vshrl.u32 %v441, 7
      %v443 = vsub.s32 0, %v442
      %v444 = vrot.slane %v439, %v443
      %v445 = vlaneseq
      %v446 = vshrl.u32 %v445, 7
      %v447 = vsub.s32 1, %v446
      %v448 = vrot.slane %v439, %v447
      %v451 = vmul.f32 %v436, %v444
      %v452 = vmul.f32 %v437, %v448
      %453 = vrot.lane.b32.xlu0 %v325, 113
      %v454 = vpop.permute.xlu0 %453
      %455 = vrot.lane.b32.xlu0 %v326, 113
      %v456 = vpop.permute.xlu0 %455
      %vm457 = vcmp.lt.s32.totalorder %v332, 113
      %v458 = vsel %vm457, %v454, %v456
      %v459 = vsel %vm457, %v456, %v454
      %s460 = scalar_lea.vmem %s5, 12
      %v461 = vld [vmem:[%s460] sm:$0x3]
      %v463 = vlaneseq
      %v464 = vshrl.u32 %v463, 7
      %v465 = vsub.s32 0, %v464
      %v466 = vrot.slane %v461, %v465
      %v467 = vlaneseq
      %v468 = vshrl.u32 %v467, 7
      %v469 = vsub.s32 1, %v468
      %v470 = vrot.slane %v461, %v469
      %v473 = vmul.f32 %v458, %v466
      %v474 = vmul.f32 %v459, %v470
      %475 = vrot.lane.b32.xlu0 %v325, 112
      %v476 = vpop.permute.xlu0 %475
      %477 = vrot.lane.b32.xlu0 %v326, 112
      %v478 = vpop.permute.xlu0 %477
      %vm479 = vcmp.lt.s32.totalorder %v332, 112
      %v480 = vsel %vm479, %v476, %v478
      %v481 = vsel %vm479, %v478, %v476
      %s482 = scalar_lea.vmem %s5, 14
      %v483 = vld [vmem:[%s482] sm:$0x3]
      %v485 = vlaneseq
      %v486 = vshrl.u32 %v485, 7
      %v487 = vsub.s32 0, %v486
      %v488 = vrot.slane %v483, %v487
      %v489 = vlaneseq
      %v490 = vshrl.u32 %v489, 7
      %v491 = vsub.s32 1, %v490
      %v492 = vrot.slane %v483, %v491
      %v495 = vmul.f32 %v480, %v488
      %v496 = vmul.f32 %v481, %v492
      %497 = vrot.lane.b32.xlu0 %v325, 111
      %v498 = vpop.permute.xlu0 %497
      %499 = vrot.lane.b32.xlu0 %v326, 111
      %v500 = vpop.permute.xlu0 %499
      %vm501 = vcmp.lt.s32.totalorder %v332, 111
      %v502 = vsel %vm501, %v498, %v500
      %v503 = vsel %vm501, %v500, %v498
      %s504 = scalar_lea.vmem %s5, 16
      %v505 = vld [vmem:[%s504] sm:$0x3]
      %v507 = vlaneseq
      %v508 = vshrl.u32 %v507, 7
      %v509 = vsub.s32 0, %v508
      %v510 = vrot.slane %v505, %v509
      %v511 = vlaneseq
      %v512 = vshrl.u32 %v511, 7
      %v513 = vsub.s32 1, %v512
      %v514 = vrot.slane %v505, %v513
      %v517 = vmul.f32 %v502, %v510
      %v518 = vmul.f32 %v503, %v514
      %v519 = vpack.c.bf16 %v370, %v348
      %v520 = vpack.c.bf16 %v371, %v349
      %v521 = vpack.c.bf16 %v414, %v392
      %v522 = vpack.c.bf16 %v415, %v393
      %v523 = vpack.c.bf16 %v451, %v429
      %v524 = vpack.c.bf16 %v452, %v430
      %v525 = vpack.c.bf16 %v495, %v473
      %v526 = vpack.c.bf16 %v496, %v474
      %v527 = vpack.c.bf16 %v517, %v517
      %v528 = vpack.c.bf16 %v518, %v518
      %v529 = vld [vmem:[%s3] sm:$0xf]
      %v530 = vld [vmem:[%s4] sm:$0xff]
      %532 = vset.pattern.permute.xlu0 0
      %533 = vperm.xlu0 %532, %v530
      %v534 = vpop.permute.xlu0 %533
      %vm536 = vcmask 588800
      %v538 = vsel %vm536, %v529, 0
      %vm540 = vcmask 1043456
      %v542 = vsel %vm540, %v527, 0
      %v545 = vsel %vm540, %v528, 0
      %547 = vmatprep.subr.bf16.mxu0 0
      %548 = vmatpush1.bf16.msra.mxu0 0
      %549 = vmatprep.subr.bf16.mxu0 0
      %550 = vmatpush1.bf16.msra.mxu0 0
      %551 = vmatprep.subr.bf16.mxu0 0
      %552 = vmatpush1.bf16.msra.mxu0 0
      %553 = vmatprep.subr.bf16.mxu0 %v545
      %554 = vmatpush1.bf16.msra.mxu0 %v542
      %555 = vmatprep.subr.bf16.mxu0 %v526
      %556 = vmatpush1.bf16.msra.mxu0 %v525
      %557 = vmatprep.subr.bf16.mxu0 %v524
      %558 = vmatpush1.bf16.msra.mxu0 %v523
      %559 = vmatprep.subr.bf16.mxu0 %v522
      %560 = vmatpush1.bf16.msra.mxu0 %v521
      %561 = vmatprep.subr.bf16.mxu0 %v520
      %562 = vmatpush1.bf16.msra.mxu0 %v519
      %563 = vmatprep.subr.bf16.mxu0 0
      %564 = vmatpush2.bf16.msra.mxu0 0
      %565 = vmatprep.subr.bf16.mxu0 0
      %566 = vmatpush2.bf16.msra.mxu0 0
      %567 = vmatprep.subr.bf16.mxu0 0
      %568 = vmatpush2.bf16.msra.mxu0 0
      %569 = vmatprep.subr.bf16.mxu0 0
      %570 = vmatpush2.bf16.msra.mxu0 0
      %571 = vmatprep.subr.bf16.mxu0 0
      %572 = vmatpush2.bf16.msra.mxu0 0
      %573 = vmatprep.subr.bf16.mxu0 0
      %574 = vmatpush2.bf16.msra.mxu0 0
      %575 = vmatprep.subr.bf16.mxu0 0
      %576 = vmatpush2.bf16.msra.mxu0 0
      %577 = vmatprep.subr.bf16.mxu0 0
      %578 = vmatpush2.bf16.msra.mxu0 0
      %579 = vmatprep.mubr.bf16.mxu0 0
      %580 = vmatmul.mubr.bf16.gmra.mxu0 %v538
      %v581 = vpop.f32.mrf.mxu0
      %v582 = vadd.f32 %v534, %v581
      %v583 = vpop.f32.mrf.mxu0
      %v584 = vadd.f32 %v534, %v583
      %v585 = vpop.f32.mrf.mxu0
      %v586 = vpop.f32.mrf.mxu0
      %587 = vdwg.mxu0
      %v588 = vld [vmem:[%s6] sm:$0xff]
      %v589 = vld [vmem:[%s6 + $0x8] sm:$0xff]
      %v590 = vadd.f32 %v582, %v588
      %v591 = vadd.f32 %v584, %v589
      %v592 = vmul.f32 %v590, %v590
      %v593 = vmul.f32 %v591, %v591
      %v594 = vrot.slane %v592, 4
      %v595 = vadd.f32 %v592, %v594
      %v596 = vrot.slane %v595, 2
      %v597 = vadd.f32 %v595, %v596
      %v598 = vrot.slane %v597, 1
      %v599 = vadd.f32 %v597, %v598
      %v600 = vrot.slane %v593, 4
      %v601 = vadd.f32 %v593, %v600
      %v602 = vrot.slane %v601, 2
      %v603 = vadd.f32 %v601, %v602
      %v604 = vrot.slane %v603, 1
      %v605 = vadd.f32 %v603, %v604
      %v606 = vrcp.pop 8.0
      %v607 = vmul.f32 %v599, %v606
      %v608 = vmul.f32 %v605, %v606
      %v609 = vadd.f32 %v607, 1e-05
      %v610 = vadd.f32 %v608, 1e-05
      %v611 = vrsqrt.pop %v609
      %v612 = vrsqrt.pop %v610
      %v613 = vmul.f32 %v590, %v611
      %v614 = vmul.f32 %v591, %v612
      %v615 = vld [vmem:[%s7] sm:$0xff]
      %617 = vset.pattern.permute.xlu0 0
      %618 = vperm.xlu0 %617, %v615
      %v619 = vpop.permute.xlu0 %618
      %v621 = vmul.f32 %v613, %v619
      %v622 = vmul.f32 %v614, %v619
      %v623 = vadd.f32 %v621, %v588
      %v624 = vadd.f32 %v622, %v589
      %v625 = vadd.f32 %v623, %v582
      %v626 = vadd.f32 %v624, %v584
      %627 = vst [vmem:[%s305] sm:$0xff] %v625
      %628 = vst [vmem:[%s305 + $0x8] sm:$0xff] %v626
      %p629 = scmp.lt.s32.totalorder %s19, 1
      %s630 = scalar_select %p629, %s19, 1
      %s631 = smul.addr %s630, 2
      %s632 = smul.addr %s631, 8
      %s633 = scalar_lea.vmem %s8, %s632
      // Predicated region
      $region53: #{_lambda_.2} parent=51 // pred_check
        %p634 = pneg %p210
      $region54: #{_lambda_.2} parent=51 // pred_check_branch
        %636 = sbr.rel (%p634) target = $region56
      $region55: #{_lambda_.2} parent=51 // pred_region
        _
      $region56: #{_lambda_.2} parent=51 // pred_fallthru
        _
    $region52: #{_lambda_.2} parent=5 // pred_fallthru
      _
    %p637 = scmp.le.s32.totalorder 2, %s14
    // Predicated region
    $region57: #{_lambda_.2} parent=5 // pred_check
      %p638 = pneg %p637
    $region58: #{_lambda_.2} parent=5 // pred_check_branch
      %640 = sbr.rel (%p638) target = $region60
    $region59: #{_lambda_.2} parent=5 // pred_region
      %s641 = ssub.s32 %s14, 2
      // Predicated region
      $region61: #{_lambda_.2} parent=59 // pred_check
        %p642 = pneg %p216
      $region62: #{_lambda_.2} parent=59 // pred_check_branch
        %644 = sbr.rel (%p642) target = $region64
      $region63: #{_lambda_.2} parent=59 // pred_region
        %p645 = scmp.lt.s32.totalorder %s20, 1
        %s646 = scalar_select %p645, %s20, 1
        %s647 = smul.addr %s646, 2
        %s648 = smul.addr %s647, 8
        %s649 = scalar_lea.vmem %s8, %s648
      $region64: #{_lambda_.2} parent=59 // pred_fallthru
        _
    $region60: #{_lambda_.2} parent=5 // pred_fallthru
      _
  $region6: #{_lambda_.2} parent=0 // loop_footer
    %s18 = sadd.s32 1, %s14
  $region7: #{_lambda_.2} parent=0 // loop_footer_branch
    %13 = sbr.rel target = $region3
  $region8: #{_lambda_.2} parent=0 // loop_exit
    _

</llo_original>
